<compile_context>
chip_gen: v5e
topology: v5e:2x2
jax: 0.10.0
libtpu: 0.0.40
codegen_flags: <defaults>
</compile_context>

<pallas_src>
import functools

import jax
import jax.numpy as jnp
from jax import lax
from jax.experimental import pallas as pl
from jax.experimental.pallas import tpu as pltpu


def mha_flash_kernel(xq_ref, xkv_ref, wq_ref, bq_ref, wkv_ref, bkv_ref,
                     wl_ref, bl_ref, o_ref,
                     q_sc, m_sc, l_sc, acc_sc, *,
                     num_heads, head_dim, tq, tk, compute_dtype):
    qi = pl.program_id(1)
    ki = pl.program_id(2)
    nk = pl.num_programs(2)
    C = num_heads * head_dim
    cd = compute_dtype

    # ---- per-(batch, q-tile) init: project Q once, reset online-softmax state ----
    @pl.when(ki == 0)
    def _init():
        xq = xq_ref[0].astype(cd)                                       # (tq, C)
        q = jnp.dot(xq, wq_ref[...].astype(cd),
                    preferred_element_type=jnp.float32) + bq_ref[...]   # scale folded in
        q_sc[...] = q
        m_sc[...] = jnp.full(m_sc.shape, -jnp.inf, dtype=m_sc.dtype)
        l_sc[...] = jnp.zeros(l_sc.shape, dtype=l_sc.dtype)
        acc_sc[...] = jnp.zeros(acc_sc.shape, dtype=acc_sc.dtype)

    # ---- causal tile skip: KV tiles strictly above the diagonal do no work ----
    @pl.when(ki * tk <= qi * tq + (tq - 1))
    def _compute():
        xkv = xkv_ref[0].astype(cd)                                     # (tk, C)
        kv = jnp.dot(xkv, wkv_ref[...].astype(cd),
                     preferred_element_type=jnp.float32) + bkv_ref[...]  # (tk, 2C)
        k_all = kv[:, :C].astype(cd)
        v_all = kv[:, C:].astype(cd)
        q_all = q_sc[...].astype(cd)                                    # (tq, C)

        # global causal mask for this (q-tile, kv-tile) pair, hoisted out of head loop
        row = qi * tq + lax.broadcasted_iota(jnp.int32, (tq, tk), 0)
        col = ki * tk + lax.broadcasted_iota(jnp.int32, (tq, tk), 1)
        causal = col <= row

        for h in range(num_heads):                 # static -> compile-safe lane slices
            lo = h * head_dim
            hi = lo + head_dim
            qh = q_all[:, lo:hi]                   # (tq, Dh)
            kh = k_all[:, lo:hi]                   # (tk, Dh)
            vh = v_all[:, lo:hi]                   # (tk, Dh)

            # contract last dims directly (no .T relayout)
            s = lax.dot_general(qh, kh, (((1,), (1,)), ((), ())),
                                preferred_element_type=jnp.float32)     # (tq, tk)
            s = jnp.where(causal, s, -jnp.inf)

            m_prev = m_sc[h]                                            # (tq, 1)
            m_new = jnp.maximum(m_prev, jnp.max(s, axis=-1, keepdims=True))
            alpha = jnp.exp(m_prev - m_new)
            p = jnp.exp(s - m_new)
            l_sc[h] = alpha * l_sc[h] + jnp.sum(p, axis=-1, keepdims=True)
            pv = jnp.dot(p.astype(cd), vh,
                         preferred_element_type=jnp.float32)            # (tq, Dh)
            acc_sc[:, lo:hi] = alpha * acc_sc[:, lo:hi] + pv
            m_sc[h] = m_new

    # ---- finalize: normalize, then ONE lane-dense (tq, C) @ (C, C) output matmul ----
    @pl.when(ki == nk - 1)
    def _finalize():
        for h in range(num_heads):
            lo = h * head_dim
            hi = lo + head_dim
            acc_sc[:, lo:hi] = acc_sc[:, lo:hi] * pl.reciprocal(l_sc[h], approx=False)
        out = jnp.dot(acc_sc[...].astype(cd), wl_ref[...].astype(cd),
                      preferred_element_type=jnp.float32) + bl_ref[...]
        o_ref[0] = out.astype(o_ref.dtype)


def _choose_tile(total, target):
    """Largest divisor of `total` that is <= target and a multiple of 8
    (falls back to `total`, i.e. no tiling, when none exists)."""
    if total <= target:
        return total
    for t in range(target, 7, -1):
        if total % t == 0 and t % 8 == 0:
            return t
    return total


def _const_block_spec(shape):
    """Weight/bias blocks are constant across the grid -> single-buffer them
    (Pallas double-buffers every input by default, wasting VMEM for constants)."""
    index_map = lambda b, qi, ki: (0,) * len(shape)
    try:
        return pl.BlockSpec(shape, index_map, pipeline_mode=pl.Buffered(1))
    except Exception:  # pipeline_mode / Buffered(1) unsupported in this jax build
        return pl.BlockSpec(shape, index_map)


def _vmem_limit_bytes(tq, tk, C, num_heads):
    f32 = 4
    act_blocks = 2 * (tq * C + tk * C + tq * C) * f32      # double-buffered x_q, x_kv, out
    weights = (4 * C * C + 4 * C) * f32                    # single-buffered weights/biases
    scratch = (2 * tq * C + 2 * num_heads * tq) * f32      # q / acc / m / l scratch
    temps = (tq * tk + tk * 2 * C + tq * C) * f32          # live values inside one step
    est = 2 * (act_blocks + weights + scratch + temps)     # ~2x headroom
    cap = 128 * 1024 * 1024
    try:
        cap = pltpu.get_tpu_info().vmem_capacity_bytes     # 64 MiB on v7x, 128 on v5e/v6e
    except Exception:
        pass
    return int(min(max(32 * 1024 * 1024, est), int(0.75 * cap)))


def multi_head_attention(x, wq, bq, wk, bk, wv, bv, wl_t, bl, *, num_heads,
                         q_tile=256, kv_tile=256, compute_dtype=jnp.float32):
    """x: (B, T, C); per-head weights wq/wk/wv: (H, C, Dh), biases (H, Dh);
    output linear pre-transposed wl_t: (C, C), bias bl: (C,)."""
    B, T, C = x.shape
    assert C % num_heads == 0
    head_dim = C // num_heads
    scale = 1.0 / jnp.sqrt(jnp.float32(head_dim))

    # Fold the attention scale into the Q projection (exact reassociation).
    wq_s = wq * scale
    bq_s = bq * scale

    def stack(w):  # (H, C, Dh) -> (C, H*Dh), columns ordered head-major
        return jnp.transpose(w, (1, 0, 2)).reshape(C, num_heads * head_dim)

    wq2 = stack(wq_s)                                                   # (C, C)
    bq2 = bq_s.reshape(1, C)
    wkv = jnp.concatenate([stack(wk), stack(wv)], axis=1)               # (C, 2C)
    bkv = jnp.concatenate([bk.reshape(-1), bv.reshape(-1)]).reshape(1, 2 * C)
    bl2 = bl.reshape(1, C)

    tq = _choose_tile(T, q_tile)
    tk = _choose_tile(T, kv_tile)
    nq, nk = T // tq, T // tk

    kern = functools.partial(mha_flash_kernel, num_heads=num_heads,
                             head_dim=head_dim, tq=tq, tk=tk,
                             compute_dtype=compute_dtype)

    grid_spec = pltpu.PrefetchScalarGridSpec(
        num_scalar_prefetch=0,
        grid=(B, nq, nk),
        in_specs=[
            pl.BlockSpec((1, tq, C), lambda b, qi, ki: (b, qi, 0)),     # x rows for Q
            pl.BlockSpec((1, tk, C), lambda b, qi, ki: (b, ki, 0)),     # x rows for K/V
            _const_block_spec((C, C)), _const_block_spec((1, C)),       # Wq (scaled), bq
            _const_block_spec((C, 2 * C)), _const_block_spec((1, 2 * C)),  # Wkv, bkv
            _const_block_spec((C, C)), _const_block_spec((1, C)),       # Wl^T, bl
        ],
        out_specs=pl.BlockSpec((1, tq, C), lambda b, qi, ki: (b, qi, 0)),
        scratch_shapes=[
            pltpu.VMEM((tq, C), jnp.float32),                # Q (scaled, bias added)
            pltpu.VMEM((num_heads, tq, 1), jnp.float32),     # running row max
            pltpu.VMEM((num_heads, tq, 1), jnp.float32),     # running softmax denom
            pltpu.VMEM((tq, C), jnp.float32),                # per-head output accumulator
        ],
    )

    return pl.pallas_call(
        kern,
        out_shape=jax.ShapeDtypeStruct((B, T, C), x.dtype),
        grid_spec=grid_spec,
        compiler_params=pltpu.CompilerParams(
            dimension_semantics=("parallel", "parallel", "arbitrary"),
            vmem_limit_bytes=_vmem_limit_bytes(tq, tk, C, num_heads)),
    )(x, x, wq2, bq2, wkv, bkv, wl_t, bl2)


def reference(x, wq, bq, wk, bk, wv, bv, wl_t, bl, *, num_heads):
    """Pure-JAX reference matching the PyTorch forward."""
    B, T, C = x.shape
    head_dim = C // num_heads
    scale = 1.0 / jnp.sqrt(jnp.float32(head_dim))
    causal = jnp.tril(jnp.ones((T, T), dtype=bool))
    outs = []
    for h in range(num_heads):
        q = x @ wq[h] + bq[h]
        k = x @ wk[h] + bk[h]
        v = x @ wv[h] + bv[h]
        s = jnp.einsum("btd,bsd->bts", q, k) * scale
        s = jnp.where(causal[None], s, -jnp.inf)
        p = jax.nn.softmax(s, axis=2)
        outs.append(jnp.einsum("bts,bsd->btd", p, v))
    concat = jnp.concatenate(outs, axis=-1)
    return concat @ wl_t + bl


if __name__ == "__main__":
    B, T, dim, num_heads, max_seq_len = 2, 16, 32, 4, 16
    head_dim = dim // num_heads

    key = jax.random.PRNGKey(0)
    ks = jax.random.split(key, 10)

    def uni(k, shape, fan_in):
        bound = 1.0 / jnp.sqrt(jnp.float32(fan_in))
        return jax.random.uniform(k, shape, jnp.float32, -bound, bound)

    x = jax.random.normal(ks[0], (B, T, dim), jnp.float32)
    # per-head projection weights, stacked: (H, C, Dh), biases (H, Dh)
    wq = uni(ks[1], (num_heads, dim, head_dim), dim)
    bq = uni(ks[2], (num_heads, head_dim), dim)
    wk = uni(ks[3], (num_heads, dim, head_dim), dim)
    bk = uni(ks[4], (num_heads, head_dim), dim)
    wv = uni(ks[5], (num_heads, dim, head_dim), dim)
    bv = uni(ks[6], (num_heads, head_dim), dim)
    # output linear, pre-transposed: (C, C), bias (C,)
    wl_t = uni(ks[7], (dim, dim), dim)
    bl = uni(ks[8], (dim,), dim)

    # Small tiles (q_tile=kv_tile=8 over T=16) so the demo exercises the multi-tile
    # online-softmax path and the causal KV-tile skip; f32 keeps the 1e-5 check exact.
    out = multi_head_attention(x, wq, bq, wk, bk, wv, bv, wl_t, bl,
                               num_heads=num_heads, q_tile=8, kv_tile=8,
                               compute_dtype=jnp.float32)
    out = jax.block_until_ready(out)

    ref = reference(x, wq, bq, wk, bk, wv, bv, wl_t, bl, num_heads=num_heads)
    assert out.shape == (B, T, dim)
    assert jnp.allclose(out, ref, atol=1e-5, rtol=1e-5), "mismatch vs reference"

    print("KERNEL_OK")
</pallas_src>

<mosaic_0001>
module attributes {stable_mosaic.version = 11 : i64} {
  func.func @mha_flash_kernel(%arg0: i32, %arg1: i32, %arg2: i32, %arg3: memref<1x8x32xf32, #tpu.memory_space<vmem>>, %arg4: memref<1x8x32xf32, #tpu.memory_space<vmem>>, %arg5: memref<32x32xf32, #tpu.memory_space<vmem>>, %arg6: memref<1x32xf32, #tpu.memory_space<vmem>>, %arg7: memref<32x64xf32, #tpu.memory_space<vmem>>, %arg8: memref<1x64xf32, #tpu.memory_space<vmem>>, %arg9: memref<32x32xf32, #tpu.memory_space<vmem>>, %arg10: memref<1x32xf32, #tpu.memory_space<vmem>>, %arg11: memref<1x8x32xf32, #tpu.memory_space<vmem>>, %arg12: memref<8x32xf32, #tpu.memory_space<vmem>>, %arg13: memref<4x8x1xf32, #tpu.memory_space<vmem>>, %arg14: memref<4x8x1xf32, #tpu.memory_space<vmem>>, %arg15: memref<8x32xf32, #tpu.memory_space<vmem>>) attributes {dimension_semantics = [#tpu.dimension_semantics<parallel>, #tpu.dimension_semantics<parallel>, #tpu.dimension_semantics<arbitrary>], iteration_bounds = array<i64: 2, 2, 2>, scalar_prefetch = 0 : i64, scratch_operands = 4 : i64, tpu.core_type = #tpu.core_type<tc>, window_params = [{transform_indices = @transform_0, window_bounds = array<i64: 1, 8, 32>}, {transform_indices = @transform_1, window_bounds = array<i64: 1, 8, 32>}, {pipeline_mode = #tpu.pipeline_mode<synchronous>, transform_indices = @transform_2, window_bounds = array<i64: 32, 32>}, {pipeline_mode = #tpu.pipeline_mode<synchronous>, transform_indices = @transform_3, window_bounds = array<i64: 1, 32>}, {pipeline_mode = #tpu.pipeline_mode<synchronous>, transform_indices = @transform_4, window_bounds = array<i64: 32, 64>}, {pipeline_mode = #tpu.pipeline_mode<synchronous>, transform_indices = @transform_5, window_bounds = array<i64: 1, 64>}, {pipeline_mode = #tpu.pipeline_mode<synchronous>, transform_indices = @transform_6, window_bounds = array<i64: 32, 32>}, {pipeline_mode = #tpu.pipeline_mode<synchronous>, transform_indices = @transform_7, window_bounds = array<i64: 1, 32>}, {transform_indices = @transform_8, window_bounds = array<i64: 1, 8, 32>}]} {
    %c0_i32 = arith.constant 0 : i32
    %0 = arith.cmpi eq, %arg2, %c0_i32 : i32
    %1 = arith.extui %0 : i1 to i32
    %c0_i32_0 = arith.constant 0 : i32
    %2 = arith.cmpi ne, %1, %c0_i32_0 : i32
    scf.if %2 {
      %c0 = arith.constant 0 : index
      %c0_4 = arith.constant 0 : index
      %c0_5 = arith.constant 0 : index
      %12 = vector.load %arg3[%c0, %c0_4, %c0_5] : memref<1x8x32xf32, #tpu.memory_space<vmem>>, vector<1x8x32xf32>
      %13 = vector.shape_cast %12 : vector<1x8x32xf32> to vector<8x32xf32>
      %c0_6 = arith.constant 0 : index
      %c0_7 = arith.constant 0 : index
      %14 = vector.load %arg5[%c0_6, %c0_7] : memref<32x32xf32, #tpu.memory_space<vmem>>, vector<32x32xf32>
      %cst = arith.constant dense<0.000000e+00> : vector<8x32xf32>
      %15 = tpu.matmul %13, %14, %cst {dimension_numbers = #tpu.dot_dimension_numbers<[1], [0], [0], [1], [0, 0, 1, 1], [], []>} : vector<8x32xf32>, vector<32x32xf32>, vector<8x32xf32> -> vector<8x32xf32>
      %c0_8 = arith.constant 0 : index
      %c0_9 = arith.constant 0 : index
      %16 = vector.load %arg6[%c0_8, %c0_9] : memref<1x32xf32, #tpu.memory_space<vmem>>, vector<1x32xf32>
      %17 = vector.broadcast %16 : vector<1x32xf32> to vector<8x32xf32>
      %18 = arith.addf %15, %17 : vector<8x32xf32>
      %c0_10 = arith.constant 0 : index
      %c0_11 = arith.constant 0 : index
      %19 = vector.load %arg12[%c0_10, %c0_11] : memref<8x32xf32, #tpu.memory_space<vmem>>, vector<8x32xf32>
      tpu.vector_store %arg12[%c0_10, %c0_11], %18 {strides = array<i32>} : memref<8x32xf32, #tpu.memory_space<vmem>>, vector<8x32xf32>,
      %cst_12 = arith.constant 0xFF800000 : f32
      %20 = vector.broadcast %cst_12 : f32 to vector<4x8x1xf32>
      %c0_13 = arith.constant 0 : index
      %c0_14 = arith.constant 0 : index
      %c0_15 = arith.constant 0 : index
      %21 = vector.load %arg13[%c0_13, %c0_14, %c0_15] : memref<4x8x1xf32, #tpu.memory_space<vmem>>, vector<4x8x1xf32>
      tpu.vector_store %arg13[%c0_13, %c0_14, %c0_15], %20 {strides = array<i32>} : memref<4x8x1xf32, #tpu.memory_space<vmem>>, vector<4x8x1xf32>,
      %cst_16 = arith.constant 0.000000e+00 : f32
      %22 = vector.broadcast %cst_16 : f32 to vector<4x8x1xf32>
      %c0_17 = arith.constant 0 : index
      %c0_18 = arith.constant 0 : index
      %c0_19 = arith.constant 0 : index
      %23 = vector.load %arg14[%c0_17, %c0_18, %c0_19] : memref<4x8x1xf32, #tpu.memory_space<vmem>>, vector<4x8x1xf32>
      tpu.vector_store %arg14[%c0_17, %c0_18, %c0_19], %22 {strides = array<i32>} : memref<4x8x1xf32, #tpu.memory_space<vmem>>, vector<4x8x1xf32>,
      %cst_20 = arith.constant 0.000000e+00 : f32
      %24 = vector.broadcast %cst_20 : f32 to vector<8x32xf32>
      %c0_21 = arith.constant 0 : index
      %c0_22 = arith.constant 0 : index
      %25 = vector.load %arg15[%c0_21, %c0_22] : memref<8x32xf32, #tpu.memory_space<vmem>>, vector<8x32xf32>
      tpu.vector_store %arg15[%c0_21, %c0_22], %24 {strides = array<i32>} : memref<8x32xf32, #tpu.memory_space<vmem>>, vector<8x32xf32>,
    } else {
    }
    %c8_i32 = arith.constant 8 : i32
    %3 = arith.muli %arg2, %c8_i32 : i32
    %c8_i32_1 = arith.constant 8 : i32
    %4 = arith.muli %arg1, %c8_i32_1 : i32
    %c7_i32 = arith.constant 7 : i32
    %5 = arith.addi %4, %c7_i32 : i32
    %6 = arith.cmpi sle, %3, %5 : i32
    %7 = arith.extui %6 : i1 to i32
    %c0_i32_2 = arith.constant 0 : i32
    %8 = arith.cmpi ne, %7, %c0_i32_2 : i32
    scf.if %8 {
      %c0 = arith.constant 0 : index
      %c0_4 = arith.constant 0 : index
      %c0_5 = arith.constant 0 : index
      %12 = vector.load %arg4[%c0, %c0_4, %c0_5] : memref<1x8x32xf32, #tpu.memory_space<vmem>>, vector<1x8x32xf32>
      %13 = vector.shape_cast %12 : vector<1x8x32xf32> to vector<8x32xf32>
      %c0_6 = arith.constant 0 : index
      %c0_7 = arith.constant 0 : index
      %14 = vector.load %arg7[%c0_6, %c0_7] : memref<32x64xf32, #tpu.memory_space<vmem>>, vector<32x64xf32>
      %cst = arith.constant dense<0.000000e+00> : vector<8x64xf32>
      %15 = tpu.matmul %13, %14, %cst {dimension_numbers = #tpu.dot_dimension_numbers<[1], [0], [0], [1], [0, 0, 1, 1], [], []>} : vector<8x32xf32>, vector<32x64xf32>, vector<8x64xf32> -> vector<8x64xf32>
      %c0_8 = arith.constant 0 : index
      %c0_9 = arith.constant 0 : index
      %16 = vector.load %arg8[%c0_8, %c0_9] : memref<1x64xf32, #tpu.memory_space<vmem>>, vector<1x64xf32>
      %17 = vector.broadcast %16 : vector<1x64xf32> to vector<8x64xf32>
      %18 = arith.addf %15, %17 : vector<8x64xf32>
      %19 = vector.extract_strided_slice %18 {offsets = [0, 0], sizes = [8, 32], strides = [1, 1]} : vector<8x64xf32> to vector<8x32xf32>
      %20 = vector.extract_strided_slice %18 {offsets = [0, 32], sizes = [8, 32], strides = [1, 1]} : vector<8x64xf32> to vector<8x32xf32>
      %c0_10 = arith.constant 0 : index
      %c0_11 = arith.constant 0 : index
      %21 = vector.load %arg12[%c0_10, %c0_11] : memref<8x32xf32, #tpu.memory_space<vmem>>, vector<8x32xf32>
      %c8_i32_12 = arith.constant 8 : i32
      %22 = arith.muli %arg1, %c8_i32_12 : i32
      %23 = tpu.iota {dimensions = array<i32: 0>} : vector<8x8xi32>
      %24 = vector.broadcast %22 : i32 to vector<8x8xi32>
      %25 = arith.addi %24, %23 : vector<8x8xi32>
      %c8_i32_13 = arith.constant 8 : i32
      %26 = arith.muli %arg2, %c8_i32_13 : i32
      %27 = tpu.iota {dimensions = array<i32: 1>} : vector<8x8xi32>
      %28 = vector.broadcast %26 : i32 to vector<8x8xi32>
      %29 = arith.addi %28, %27 : vector<8x8xi32>
      %30 = arith.cmpi sle, %29, %25 : vector<8x8xi32>
      %31 = vector.extract_strided_slice %21 {offsets = [0, 0], sizes = [8, 8], strides = [1, 1]} : vector<8x32xf32> to vector<8x8xf32>
      %32 = vector.extract_strided_slice %19 {offsets = [0, 0], sizes = [8, 8], strides = [1, 1]} : vector<8x32xf32> to vector<8x8xf32>
      %33 = vector.extract_strided_slice %20 {offsets = [0, 0], sizes = [8, 8], strides = [1, 1]} : vector<8x32xf32> to vector<8x8xf32>
      %cst_14 = arith.constant dense<0.000000e+00> : vector<8x8xf32>
      %34 = tpu.matmul %31, %32, %cst_14 {dimension_numbers = #tpu.dot_dimension_numbers<[1], [1], [0], [0], [0, 0, 1, 0], [], []>} : vector<8x8xf32>, vector<8x8xf32>, vector<8x8xf32> -> vector<8x8xf32>
      %cst_15 = arith.constant 0xFF800000 : f32
      %35 = vector.broadcast %cst_15 : f32 to vector<8x8xf32>
      %36 = arith.select %30, %34, %35 : vector<8x8xi1>, vector<8x8xf32>
      %c0_16 = arith.constant 0 : index
      %c0_17 = arith.constant 0 : index
      %c0_18 = arith.constant 0 : index
      %37 = vector.load %arg13[%c0_16, %c0_17, %c0_18] : memref<4x8x1xf32, #tpu.memory_space<vmem>>, vector<1x8x1xf32>
      %38 = vector.shape_cast %37 : vector<1x8x1xf32> to vector<8x1xf32>
      %cst_19 = arith.constant dense<0xFF800000> : vector<8xf32>
      %39 = vector.multi_reduction <maximumf>, %36, %cst_19 [1] : vector<8x8xf32> to vector<8xf32>
      %40 = vector.shape_cast %39 : vector<8xf32> to vector<8x1xf32>
      %41 = arith.maximumf %38, %40 : vector<8x1xf32>
      %42 = arith.subf %38, %41 : vector<8x1xf32>
      %43 = math.exp %42 : vector<8x1xf32>
      %44 = vector.broadcast %41 : vector<8x1xf32> to vector<8x8xf32>
      %45 = arith.subf %36, %44 : vector<8x8xf32>
      %46 = math.exp %45 : vector<8x8xf32>
      %c0_20 = arith.constant 0 : index
      %c0_21 = arith.constant 0 : index
      %c0_22 = arith.constant 0 : index
      %47 = vector.load %arg14[%c0_20, %c0_21, %c0_22] : memref<4x8x1xf32, #tpu.memory_space<vmem>>, vector<1x8x1xf32>
      %48 = vector.shape_cast %47 : vector<1x8x1xf32> to vector<8x1xf32>
      %49 = arith.mulf %43, %48 : vector<8x1xf32>
      %cst_23 = arith.constant dense<0.000000e+00> : vector<8xf32>
      %50 = vector.multi_reduction <add>, %46, %cst_23 [1] : vector<8x8xf32> to vector<8xf32>
      %51 = vector.shape_cast %50 : vector<8xf32> to vector<8x1xf32>
      %52 = arith.addf %49, %51 : vector<8x1xf32>
      %c0_24 = arith.constant 0 : index
      %c0_25 = arith.constant 0 : index
      %c0_26 = arith.constant 0 : index
      %53 = vector.load %arg14[%c0_24, %c0_25, %c0_26] : memref<4x8x1xf32, #tpu.memory_space<vmem>>, vector<1x8x1xf32>
      %54 = vector.shape_cast %53 : vector<1x8x1xf32> to vector<8x1xf32>
      %55 = vector.shape_cast %52 : vector<8x1xf32> to vector<1x8x1xf32>
      tpu.vector_store %arg14[%c0_24, %c0_25, %c0_26], %55 {strides = array<i32>} : memref<4x8x1xf32, #tpu.memory_space<vmem>>, vector<1x8x1xf32>,
      %cst_27 = arith.constant dense<0.000000e+00> : vector<8x8xf32>
      %56 = tpu.matmul %46, %33, %cst_27 {dimension_numbers = #tpu.dot_dimension_numbers<[1], [0], [0], [1], [0, 0, 1, 1], [], []>} : vector<8x8xf32>, vector<8x8xf32>, vector<8x8xf32> -> vector<8x8xf32>
      %c0_28 = arith.constant 0 : index
      %c0_29 = arith.constant 0 : index
      %57 = vector.load %arg15[%c0_28, %c0_29] : memref<8x32xf32, #tpu.memory_space<vmem>>, vector<8x8xf32>
      %58 = vector.broadcast %43 : vector<8x1xf32> to vector<8x8xf32>
      %59 = arith.mulf %58, %57 : vector<8x8xf32>
      %60 = arith.addf %59, %56 : vector<8x8xf32>
      %c0_30 = arith.constant 0 : index
      %c0_31 = arith.constant 0 : index
      %61 = vector.load %arg15[%c0_30, %c0_31] : memref<8x32xf32, #tpu.memory_space<vmem>>, vector<8x8xf32>
      tpu.vector_store %arg15[%c0_30, %c0_31], %60 {strides = array<i32>} : memref<8x32xf32, #tpu.memory_space<vmem>>, vector<8x8xf32>,
      %c0_32 = arith.constant 0 : index
      %c0_33 = arith.constant 0 : index
      %c0_34 = arith.constant 0 : index
      %62 = vector.load %arg13[%c0_32, %c0_33, %c0_34] : memref<4x8x1xf32, #tpu.memory_space<vmem>>, vector<1x8x1xf32>
      %63 = vector.shape_cast %62 : vector<1x8x1xf32> to vector<8x1xf32>
      %64 = vector.shape_cast %41 : vector<8x1xf32> to vector<1x8x1xf32>
      tpu.vector_store %arg13[%c0_32, %c0_33, %c0_34], %64 {strides = array<i32>} : memref<4x8x1xf32, #tpu.memory_space<vmem>>, vector<1x8x1xf32>,
      %65 = vector.extract_strided_slice %21 {offsets = [0, 8], sizes = [8, 8], strides = [1, 1]} : vector<8x32xf32> to vector<8x8xf32>
      %66 = vector.extract_strided_slice %19 {offsets = [0, 8], sizes = [8, 8], strides = [1, 1]} : vector<8x32xf32> to vector<8x8xf32>
      %67 = vector.extract_strided_slice %20 {offsets = [0, 8], sizes = [8, 8], strides = [1, 1]} : vector<8x32xf32> to vector<8x8xf32>
      %cst_35 = arith.constant dense<0.000000e+00> : vector<8x8xf32>
      %68 = tpu.matmul %65, %66, %cst_35 {dimension_numbers = #tpu.dot_dimension_numbers<[1], [1], [0], [0], [0, 0, 1, 0], [], []>} : vector<8x8xf32>, vector<8x8xf32>, vector<8x8xf32> -> vector<8x8xf32>
      %cst_36 = arith.constant 0xFF800000 : f32
      %69 = vector.broadcast %cst_36 : f32 to vector<8x8xf32>
      %70 = arith.select %30, %68, %69 : vector<8x8xi1>, vector<8x8xf32>
      %c1 = arith.constant 1 : index
      %c0_37 = arith.constant 0 : index
      %c0_38 = arith.constant 0 : index
      %71 = vector.load %arg13[%c1, %c0_37, %c0_38] : memref<4x8x1xf32, #tpu.memory_space<vmem>>, vector<1x8x1xf32>
      %72 = vector.shape_cast %71 : vector<1x8x1xf32> to vector<8x1xf32>
      %cst_39 = arith.constant dense<0xFF800000> : vector<8xf32>
      %73 = vector.multi_reduction <maximumf>, %70, %cst_39 [1] : vector<8x8xf32> to vector<8xf32>
      %74 = vector.shape_cast %73 : vector<8xf32> to vector<8x1xf32>
      %75 = arith.maximumf %72, %74 : vector<8x1xf32>
      %76 = arith.subf %72, %75 : vector<8x1xf32>
      %77 = math.exp %76 : vector<8x1xf32>
      %78 = vector.broadcast %75 : vector<8x1xf32> to vector<8x8xf32>
      %79 = arith.subf %70, %78 : vector<8x8xf32>
      %80 = math.exp %79 : vector<8x8xf32>
      %c1_40 = arith.constant 1 : index
      %c0_41 = arith.constant 0 : index
      %c0_42 = arith.constant 0 : index
      %81 = vector.load %arg14[%c1_40, %c0_41, %c0_42] : memref<4x8x1xf32, #tpu.memory_space<vmem>>, vector<1x8x1xf32>
      %82 = vector.shape_cast %81 : vector<1x8x1xf32> to vector<8x1xf32>
      %83 = arith.mulf %77, %82 : vector<8x1xf32>
      %cst_43 = arith.constant dense<0.000000e+00> : vector<8xf32>
      %84 = vector.multi_reduction <add>, %80, %cst_43 [1] : vector<8x8xf32> to vector<8xf32>
      %85 = vector.shape_cast %84 : vector<8xf32> to vector<8x1xf32>
      %86 = arith.addf %83, %85 : vector<8x1xf32>
      %c1_44 = arith.constant 1 : index
      %c0_45 = arith.constant 0 : index
      %c0_46 = arith.constant 0 : index
      %87 = vector.load %arg14[%c1_44, %c0_45, %c0_46] : memref<4x8x1xf32, #tpu.memory_space<vmem>>, vector<1x8x1xf32>
      %88 = vector.shape_cast %87 : vector<1x8x1xf32> to vector<8x1xf32>
      %89 = vector.shape_cast %86 : vector<8x1xf32> to vector<1x8x1xf32>
      tpu.vector_store %arg14[%c1_44, %c0_45, %c0_46], %89 {strides = array<i32>} : memref<4x8x1xf32, #tpu.memory_space<vmem>>, vector<1x8x1xf32>,
      %cst_47 = arith.constant dense<0.000000e+00> : vector<8x8xf32>
      %90 = tpu.matmul %80, %67, %cst_47 {dimension_numbers = #tpu.dot_dimension_numbers<[1], [0], [0], [1], [0, 0, 1, 1], [], []>} : vector<8x8xf32>, vector<8x8xf32>, vector<8x8xf32> -> vector<8x8xf32>
      %c0_48 = arith.constant 0 : index
      %c8 = arith.constant 8 : index
      %91 = vector.load %arg15[%c0_48, %c8] : memref<8x32xf32, #tpu.memory_space<vmem>>, vector<8x8xf32>
      %92 = vector.broadcast %77 : vector<8x1xf32> to vector<8x8xf32>
      %93 = arith.mulf %92, %91 : vector<8x8xf32>
      %94 = arith.addf %93, %90 : vector<8x8xf32>
      %c0_49 = arith.constant 0 : index
      %c8_50 = arith.constant 8 : index
      %95 = vector.load %arg15[%c0_49, %c8_50] : memref<8x32xf32, #tpu.memory_space<vmem>>, vector<8x8xf32>
      tpu.vector_store %arg15[%c0_49, %c8_50], %94 {strides = array<i32>} : memref<8x32xf32, #tpu.memory_space<vmem>>, vector<8x8xf32>,
      %c1_51 = arith.constant 1 : index
      %c0_52 = arith.constant 0 : index
      %c0_53 = arith.constant 0 : index
      %96 = vector.load %arg13[%c1_51, %c0_52, %c0_53] : memref<4x8x1xf32, #tpu.memory_space<vmem>>, vector<1x8x1xf32>
      %97 = vector.shape_cast %96 : vector<1x8x1xf32> to vector<8x1xf32>
      %98 = vector.shape_cast %75 : vector<8x1xf32> to vector<1x8x1xf32>
      tpu.vector_store %arg13[%c1_51, %c0_52, %c0_53], %98 {strides = array<i32>} : memref<4x8x1xf32, #tpu.memory_space<vmem>>, vector<1x8x1xf32>,
      %99 = vector.extract_strided_slice %21 {offsets = [0, 16], sizes = [8, 8], strides = [1, 1]} : vector<8x32xf32> to vector<8x8xf32>
      %100 = vector.extract_strided_slice %19 {offsets = [0, 16], sizes = [8, 8], strides = [1, 1]} : vector<8x32xf32> to vector<8x8xf32>
      %101 = vector.extract_strided_slice %20 {offsets = [0, 16], sizes = [8, 8], strides = [1, 1]} : vector<8x32xf32> to vector<8x8xf32>
      %cst_54 = arith.constant dense<0.000000e+00> : vector<8x8xf32>
      %102 = tpu.matmul %99, %100, %cst_54 {dimension_numbers = #tpu.dot_dimension_numbers<[1], [1], [0], [0], [0, 0, 1, 0], [], []>} : vector<8x8xf32>, vector<8x8xf32>, vector<8x8xf32> -> vector<8x8xf32>
      %cst_55 = arith.constant 0xFF800000 : f32
      %103 = vector.broadcast %cst_55 : f32 to vector<8x8xf32>
      %104 = arith.select %30, %102, %103 : vector<8x8xi1>, vector<8x8xf32>
      %c2 = arith.constant 2 : index
      %c0_56 = arith.constant 0 : index
      %c0_57 = arith.constant 0 : index
      %105 = vector.load %arg13[%c2, %c0_56, %c0_57] : memref<4x8x1xf32, #tpu.memory_space<vmem>>, vector<1x8x1xf32>
      %106 = vector.shape_cast %105 : vector<1x8x1xf32> to vector<8x1xf32>
      %cst_58 = arith.constant dense<0xFF800000> : vector<8xf32>
      %107 = vector.multi_reduction <maximumf>, %104, %cst_58 [1] : vector<8x8xf32> to vector<8xf32>
      %108 = vector.shape_cast %107 : vector<8xf32> to vector<8x1xf32>
      %109 = arith.maximumf %106, %108 : vector<8x1xf32>
      %110 = arith.subf %106, %109 : vector<8x1xf32>
      %111 = math.exp %110 : vector<8x1xf32>
      %112 = vector.broadcast %109 : vector<8x1xf32> to vector<8x8xf32>
      %113 = arith.subf %104, %112 : vector<8x8xf32>
      %114 = math.exp %113 : vector<8x8xf32>
      %c2_59 = arith.constant 2 : index
      %c0_60 = arith.constant 0 : index
      %c0_61 = arith.constant 0 : index
      %115 = vector.load %arg14[%c2_59, %c0_60, %c0_61] : memref<4x8x1xf32, #tpu.memory_space<vmem>>, vector<1x8x1xf32>
      %116 = vector.shape_cast %115 : vector<1x8x1xf32> to vector<8x1xf32>
      %117 = arith.mulf %111, %116 : vector<8x1xf32>
      %cst_62 = arith.constant dense<0.000000e+00> : vector<8xf32>
      %118 = vector.multi_reduction <add>, %114, %cst_62 [1] : vector<8x8xf32> to vector<8xf32>
      %119 = vector.shape_cast %118 : vector<8xf32> to vector<8x1xf32>
      %120 = arith.addf %117, %119 : vector<8x1xf32>
      %c2_63 = arith.constant 2 : index
      %c0_64 = arith.constant 0 : index
      %c0_65 = arith.constant 0 : index
      %121 = vector.load %arg14[%c2_63, %c0_64, %c0_65] : memref<4x8x1xf32, #tpu.memory_space<vmem>>, vector<1x8x1xf32>
      %122 = vector.shape_cast %121 : vector<1x8x1xf32> to vector<8x1xf32>
      %123 = vector.shape_cast %120 : vector<8x1xf32> to vector<1x8x1xf32>
      tpu.vector_store %arg14[%c2_63, %c0_64, %c0_65], %123 {strides = array<i32>} : memref<4x8x1xf32, #tpu.memory_space<vmem>>, vector<1x8x1xf32>,
      %cst_66 = arith.constant dense<0.000000e+00> : vector<8x8xf32>
      %124 = tpu.matmul %114, %101, %cst_66 {dimension_numbers = #tpu.dot_dimension_numbers<[1], [0], [0], [1], [0, 0, 1, 1], [], []>} : vector<8x8xf32>, vector<8x8xf32>, vector<8x8xf32> -> vector<8x8xf32>
      %c0_67 = arith.constant 0 : index
      %c16 = arith.constant 16 : index
      %125 = vector.load %arg15[%c0_67, %c16] : memref<8x32xf32, #tpu.memory_space<vmem>>, vector<8x8xf32>
      %126 = vector.broadcast %111 : vector<8x1xf32> to vector<8x8xf32>
      %127 = arith.mulf %126, %125 : vector<8x8xf32>
      %128 = arith.addf %127, %124 : vector<8x8xf32>
      %c0_68 = arith.constant 0 : index
      %c16_69 = arith.constant 16 : index
      %129 = vector.load %arg15[%c0_68, %c16_69] : memref<8x32xf32, #tpu.memory_space<vmem>>, vector<8x8xf32>
      tpu.vector_store %arg15[%c0_68, %c16_69], %128 {strides = array<i32>} : memref<8x32xf32, #tpu.memory_space<vmem>>, vector<8x8xf32>,
      %c2_70 = arith.constant 2 : index
      %c0_71 = arith.constant 0 : index
      %c0_72 = arith.constant 0 : index
      %130 = vector.load %arg13[%c2_70, %c0_71, %c0_72] : memref<4x8x1xf32, #tpu.memory_space<vmem>>, vector<1x8x1xf32>
      %131 = vector.shape_cast %130 : vector<1x8x1xf32> to vector<8x1xf32>
      %132 = vector.shape_cast %109 : vector<8x1xf32> to vector<1x8x1xf32>
      tpu.vector_store %arg13[%c2_70, %c0_71, %c0_72], %132 {strides = array<i32>} : memref<4x8x1xf32, #tpu.memory_space<vmem>>, vector<1x8x1xf32>,
      %133 = vector.extract_strided_slice %21 {offsets = [0, 24], sizes = [8, 8], strides = [1, 1]} : vector<8x32xf32> to vector<8x8xf32>
      %134 = vector.extract_strided_slice %19 {offsets = [0, 24], sizes = [8, 8], strides = [1, 1]} : vector<8x32xf32> to vector<8x8xf32>
      %135 = vector.extract_strided_slice %20 {offsets = [0, 24], sizes = [8, 8], strides = [1, 1]} : vector<8x32xf32> to vector<8x8xf32>
      %cst_73 = arith.constant dense<0.000000e+00> : vector<8x8xf32>
      %136 = tpu.matmul %133, %134, %cst_73 {dimension_numbers = #tpu.dot_dimension_numbers<[1], [1], [0], [0], [0, 0, 1, 0], [], []>} : vector<8x8xf32>, vector<8x8xf32>, vector<8x8xf32> -> vector<8x8xf32>
      %cst_74 = arith.constant 0xFF800000 : f32
      %137 = vector.broadcast %cst_74 : f32 to vector<8x8xf32>
      %138 = arith.select %30, %136, %137 : vector<8x8xi1>, vector<8x8xf32>
      %c3 = arith.constant 3 : index
      %c0_75 = arith.constant 0 : index
      %c0_76 = arith.constant 0 : index
      %139 = vector.load %arg13[%c3, %c0_75, %c0_76] : memref<4x8x1xf32, #tpu.memory_space<vmem>>, vector<1x8x1xf32>
      %140 = vector.shape_cast %139 : vector<1x8x1xf32> to vector<8x1xf32>
      %cst_77 = arith.constant dense<0xFF800000> : vector<8xf32>
      %141 = vector.multi_reduction <maximumf>, %138, %cst_77 [1] : vector<8x8xf32> to vector<8xf32>
      %142 = vector.shape_cast %141 : vector<8xf32> to vector<8x1xf32>
      %143 = arith.maximumf %140, %142 : vector<8x1xf32>
      %144 = arith.subf %140, %143 : vector<8x1xf32>
      %145 = math.exp %144 : vector<8x1xf32>
      %146 = vector.broadcast %143 : vector<8x1xf32> to vector<8x8xf32>
      %147 = arith.subf %138, %146 : vector<8x8xf32>
      %148 = math.exp %147 : vector<8x8xf32>
      %c3_78 = arith.constant 3 : index
      %c0_79 = arith.constant 0 : index
      %c0_80 = arith.constant 0 : index
      %149 = vector.load %arg14[%c3_78, %c0_79, %c0_80] : memref<4x8x1xf32, #tpu.memory_space<vmem>>, vector<1x8x1xf32>
      %150 = vector.shape_cast %149 : vector<1x8x1xf32> to vector<8x1xf32>
      %151 = arith.mulf %145, %150 : vector<8x1xf32>
      %cst_81 = arith.constant dense<0.000000e+00> : vector<8xf32>
      %152 = vector.multi_reduction <add>, %148, %cst_81 [1] : vector<8x8xf32> to vector<8xf32>
      %153 = vector.shape_cast %152 : vector<8xf32> to vector<8x1xf32>
      %154 = arith.addf %151, %153 : vector<8x1xf32>
      %c3_82 = arith.constant 3 : index
      %c0_83 = arith.constant 0 : index
      %c0_84 = arith.constant 0 : index
      %155 = vector.load %arg14[%c3_82, %c0_83, %c0_84] : memref<4x8x1xf32, #tpu.memory_space<vmem>>, vector<1x8x1xf32>
      %156 = vector.shape_cast %155 : vector<1x8x1xf32> to vector<8x1xf32>
      %157 = vector.shape_cast %154 : vector<8x1xf32> to vector<1x8x1xf32>
      tpu.vector_store %arg14[%c3_82, %c0_83, %c0_84], %157 {strides = array<i32>} : memref<4x8x1xf32, #tpu.memory_space<vmem>>, vector<1x8x1xf32>,
      %cst_85 = arith.constant dense<0.000000e+00> : vector<8x8xf32>
      %158 = tpu.matmul %148, %135, %cst_85 {dimension_numbers = #tpu.dot_dimension_numbers<[1], [0], [0], [1], [0, 0, 1, 1], [], []>} : vector<8x8xf32>, vector<8x8xf32>, vector<8x8xf32> -> vector<8x8xf32>
      %c0_86 = arith.constant 0 : index
      %c24 = arith.constant 24 : index
      %159 = vector.load %arg15[%c0_86, %c24] : memref<8x32xf32, #tpu.memory_space<vmem>>, vector<8x8xf32>
      %160 = vector.broadcast %145 : vector<8x1xf32> to vector<8x8xf32>
      %161 = arith.mulf %160, %159 : vector<8x8xf32>
      %162 = arith.addf %161, %158 : vector<8x8xf32>
      %c0_87 = arith.constant 0 : index
      %c24_88 = arith.constant 24 : index
      %163 = vector.load %arg15[%c0_87, %c24_88] : memref<8x32xf32, #tpu.memory_space<vmem>>, vector<8x8xf32>
      tpu.vector_store %arg15[%c0_87, %c24_88], %162 {strides = array<i32>} : memref<8x32xf32, #tpu.memory_space<vmem>>, vector<8x8xf32>,
      %c3_89 = arith.constant 3 : index
      %c0_90 = arith.constant 0 : index
      %c0_91 = arith.constant 0 : index
      %164 = vector.load %arg13[%c3_89, %c0_90, %c0_91] : memref<4x8x1xf32, #tpu.memory_space<vmem>>, vector<1x8x1xf32>
      %165 = vector.shape_cast %164 : vector<1x8x1xf32> to vector<8x1xf32>
      %166 = vector.shape_cast %143 : vector<8x1xf32> to vector<1x8x1xf32>
      tpu.vector_store %arg13[%c3_89, %c0_90, %c0_91], %166 {strides = array<i32>} : memref<4x8x1xf32, #tpu.memory_space<vmem>>, vector<1x8x1xf32>,
    } else {
    }
    %c1_i32 = arith.constant 1 : i32
    %9 = arith.cmpi eq, %arg2, %c1_i32 : i32
    %10 = arith.extui %9 : i1 to i32
    %c0_i32_3 = arith.constant 0 : i32
    %11 = arith.cmpi ne, %10, %c0_i32_3 : i32
    scf.if %11 {
      %c0 = arith.constant 0 : index
      %c0_4 = arith.constant 0 : index
      %12 = vector.load %arg15[%c0, %c0_4] : memref<8x32xf32, #tpu.memory_space<vmem>>, vector<8x8xf32>
      %c0_5 = arith.constant 0 : index
      %c0_6 = arith.constant 0 : index
      %c0_7 = arith.constant 0 : index
      %13 = vector.load %arg14[%c0_5, %c0_6, %c0_7] : memref<4x8x1xf32, #tpu.memory_space<vmem>>, vector<1x8x1xf32>
      %14 = vector.shape_cast %13 : vector<1x8x1xf32> to vector<8x1xf32>
      %15 = tpu.reciprocal %14 : vector<8x1xf32> -> vector<8x1xf32>
      %16 = vector.broadcast %15 : vector<8x1xf32> to vector<8x8xf32>
      %17 = arith.mulf %12, %16 : vector<8x8xf32>
      %c0_8 = arith.constant 0 : index
      %c0_9 = arith.constant 0 : index
      %18 = vector.load %arg15[%c0_8, %c0_9] : memref<8x32xf32, #tpu.memory_space<vmem>>, vector<8x8xf32>
      tpu.vector_store %arg15[%c0_8, %c0_9], %17 {strides = array<i32>} : memref<8x32xf32, #tpu.memory_space<vmem>>, vector<8x8xf32>,
      %c0_10 = arith.constant 0 : index
      %c8 = arith.constant 8 : index
      %19 = vector.load %arg15[%c0_10, %c8] : memref<8x32xf32, #tpu.memory_space<vmem>>, vector<8x8xf32>
      %c1 = arith.constant 1 : index
      %c0_11 = arith.constant 0 : index
      %c0_12 = arith.constant 0 : index
      %20 = vector.load %arg14[%c1, %c0_11, %c0_12] : memref<4x8x1xf32, #tpu.memory_space<vmem>>, vector<1x8x1xf32>
      %21 = vector.shape_cast %20 : vector<1x8x1xf32> to vector<8x1xf32>
      %22 = tpu.reciprocal %21 : vector<8x1xf32> -> vector<8x1xf32>
      %23 = vector.broadcast %22 : vector<8x1xf32> to vector<8x8xf32>
      %24 = arith.mulf %19, %23 : vector<8x8xf32>
      %c0_13 = arith.constant 0 : index
      %c8_14 = arith.constant 8 : index
      %25 = vector.load %arg15[%c0_13, %c8_14] : memref<8x32xf32, #tpu.memory_space<vmem>>, vector<8x8xf32>
      tpu.vector_store %arg15[%c0_13, %c8_14], %24 {strides = array<i32>} : memref<8x32xf32, #tpu.memory_space<vmem>>, vector<8x8xf32>,
      %c0_15 = arith.constant 0 : index
      %c16 = arith.constant 16 : index
      %26 = vector.load %arg15[%c0_15, %c16] : memref<8x32xf32, #tpu.memory_space<vmem>>, vector<8x8xf32>
      %c2 = arith.constant 2 : index
      %c0_16 = arith.constant 0 : index
      %c0_17 = arith.constant 0 : index
      %27 = vector.load %arg14[%c2, %c0_16, %c0_17] : memref<4x8x1xf32, #tpu.memory_space<vmem>>, vector<1x8x1xf32>
      %28 = vector.shape_cast %27 : vector<1x8x1xf32> to vector<8x1xf32>
      %29 = tpu.reciprocal %28 : vector<8x1xf32> -> vector<8x1xf32>
      %30 = vector.broadcast %29 : vector<8x1xf32> to vector<8x8xf32>
      %31 = arith.mulf %26, %30 : vector<8x8xf32>
      %c0_18 = arith.constant 0 : index
      %c16_19 = arith.constant 16 : index
      %32 = vector.load %arg15[%c0_18, %c16_19] : memref<8x32xf32, #tpu.memory_space<vmem>>, vector<8x8xf32>
      tpu.vector_store %arg15[%c0_18, %c16_19], %31 {strides = array<i32>} : memref<8x32xf32, #tpu.memory_space<vmem>>, vector<8x8xf32>,
      %c0_20 = arith.constant 0 : index
      %c24 = arith.constant 24 : index
      %33 = vector.load %arg15[%c0_20, %c24] : memref<8x32xf32, #tpu.memory_space<vmem>>, vector<8x8xf32>
      %c3 = arith.constant 3 : index
      %c0_21 = arith.constant 0 : index
      %c0_22 = arith.constant 0 : index
      %34 = vector.load %arg14[%c3, %c0_21, %c0_22] : memref<4x8x1xf32, #tpu.memory_space<vmem>>, vector<1x8x1xf32>
      %35 = vector.shape_cast %34 : vector<1x8x1xf32> to vector<8x1xf32>
      %36 = tpu.reciprocal %35 : vector<8x1xf32> -> vector<8x1xf32>
      %37 = vector.broadcast %36 : vector<8x1xf32> to vector<8x8xf32>
      %38 = arith.mulf %33, %37 : vector<8x8xf32>
      %c0_23 = arith.constant 0 : index
      %c24_24 = arith.constant 24 : index
      %39 = vector.load %arg15[%c0_23, %c24_24] : memref<8x32xf32, #tpu.memory_space<vmem>>, vector<8x8xf32>
      tpu.vector_store %arg15[%c0_23, %c24_24], %38 {strides = array<i32>} : memref<8x32xf32, #tpu.memory_space<vmem>>, vector<8x8xf32>,
      %c0_25 = arith.constant 0 : index
      %c0_26 = arith.constant 0 : index
      %40 = vector.load %arg15[%c0_25, %c0_26] : memref<8x32xf32, #tpu.memory_space<vmem>>, vector<8x32xf32>
      %c0_27 = arith.constant 0 : index
      %c0_28 = arith.constant 0 : index
      %41 = vector.load %arg9[%c0_27, %c0_28] : memref<32x32xf32, #tpu.memory_space<vmem>>, vector<32x32xf32>
      %cst = arith.constant dense<0.000000e+00> : vector<8x32xf32>
      %42 = tpu.matmul %40, %41, %cst {dimension_numbers = #tpu.dot_dimension_numbers<[1], [0], [0], [1], [0, 0, 1, 1], [], []>} : vector<8x32xf32>, vector<32x32xf32>, vector<8x32xf32> -> vector<8x32xf32>
      %c0_29 = arith.constant 0 : index
      %c0_30 = arith.constant 0 : index
      %43 = vector.load %arg10[%c0_29, %c0_30] : memref<1x32xf32, #tpu.memory_space<vmem>>, vector<1x32xf32>
      %44 = vector.broadcast %43 : vector<1x32xf32> to vector<8x32xf32>
      %45 = arith.addf %42, %44 : vector<8x32xf32>
      %c0_31 = arith.constant 0 : index
      %c0_32 = arith.constant 0 : index
      %c0_33 = arith.constant 0 : index
      %46 = vector.load %arg11[%c0_31, %c0_32, %c0_33] : memref<1x8x32xf32, #tpu.memory_space<vmem>>, vector<1x8x32xf32>
      %47 = vector.shape_cast %46 : vector<1x8x32xf32> to vector<8x32xf32>
      %48 = vector.shape_cast %45 : vector<8x32xf32> to vector<1x8x32xf32>
      tpu.vector_store %arg11[%c0_31, %c0_32, %c0_33], %48 {strides = array<i32>} : memref<1x8x32xf32, #tpu.memory_space<vmem>>, vector<1x8x32xf32>,
    } else {
    }
    return
  }
  func.func @transform_0(%arg0: i32, %arg1: i32, %arg2: i32) -> (i32, i32, i32) {
    %c0_i32 = arith.constant 0 : i32
    %c0_i32_0 = arith.constant 0 : i32
    return %arg0, %arg1, %c0_i32 : i32, i32, i32
  }
  func.func @transform_1(%arg0: i32, %arg1: i32, %arg2: i32) -> (i32, i32, i32) {
    %c0_i32 = arith.constant 0 : i32
    %c0_i32_0 = arith.constant 0 : i32
    return %arg0, %arg2, %c0_i32 : i32, i32, i32
  }
  func.func @transform_2(%arg0: i32, %arg1: i32, %arg2: i32) -> (i32, i32) {
    %c0_i32 = arith.constant 0 : i32
    %c0_i32_0 = arith.constant 0 : i32
    %c0_i32_1 = arith.constant 0 : i32
    return %c0_i32, %c0_i32_0 : i32, i32
  }
  func.func @transform_3(%arg0: i32, %arg1: i32, %arg2: i32) -> (i32, i32) {
    %c0_i32 = arith.constant 0 : i32
    %c0_i32_0 = arith.constant 0 : i32
    %c0_i32_1 = arith.constant 0 : i32
    return %c0_i32, %c0_i32_0 : i32, i32
  }
  func.func @transform_4(%arg0: i32, %arg1: i32, %arg2: i32) -> (i32, i32) {
    %c0_i32 = arith.constant 0 : i32
    %c0_i32_0 = arith.constant 0 : i32
    %c0_i32_1 = arith.constant 0 : i32
    return %c0_i32, %c0_i32_0 : i32, i32
  }
  func.func @transform_5(%arg0: i32, %arg1: i32, %arg2: i32) -> (i32, i32) {
    %c0_i32 = arith.constant 0 : i32
    %c0_i32_0 = arith.constant 0 : i32
    %c0_i32_1 = arith.constant 0 : i32
    return %c0_i32, %c0_i32_0 : i32, i32
  }
  func.func @transform_6(%arg0: i32, %arg1: i32, %arg2: i32) -> (i32, i32) {
    %c0_i32 = arith.constant 0 : i32
    %c0_i32_0 = arith.constant 0 : i32
    %c0_i32_1 = arith.constant 0 : i32
    return %c0_i32, %c0_i32_0 : i32, i32
  }
  func.func @transform_7(%arg0: i32, %arg1: i32, %arg2: i32) -> (i32, i32) {
    %c0_i32 = arith.constant 0 : i32
    %c0_i32_0 = arith.constant 0 : i32
    %c0_i32_1 = arith.constant 0 : i32
    return %c0_i32, %c0_i32_0 : i32, i32
  }
  func.func @transform_8(%arg0: i32, %arg1: i32, %arg2: i32) -> (i32, i32, i32) {
    %c0_i32 = arith.constant 0 : i32
    %c0_i32_0 = arith.constant 0 : i32
    return %arg0, %arg1, %c0_i32 : i32, i32, i32
  }
}

</mosaic_0001>

<llo_original>
// kernel: tpu_custom_call.1
$region0: #{tpu_custom_call.1}
  #allocation0 [shape = 'u32[]', space=smem, size = 0x4, offset = 0x4, fixed_abs, tag = 'smem constant byte address 0x4 - core index']
  #allocation1 [shape = 'u32[72,128]{1,0:T(1,128)}', space=vmem, size = 0x9000, scoped, tag = 'internal scratch']
  #allocation2 [shape = 'f32[8,32]{1,0:T(8,128)}', space=vmem, size = 0x1000, scoped, tag = 'scratch operand']
  #allocation3 [shape = 'f32[4,8,1]{2,1,0:T(8,128)}', space=vmem, size = 0x4000, scoped, tag = 'scratch operand']
  #allocation4 [shape = 'f32[4,8,1]{2,1,0:T(8,128)}', space=vmem, size = 0x4000, scoped, tag = 'scratch operand']
  #allocation5 [shape = 'f32[8,32]{1,0:T(8,128)}', space=vmem, size = 0x1000, scoped, tag = 'scratch operand']
  %s0 = inlined_call_operand.hbm [shape: f32[2,16,32], index: 0, kind: input, shape index: {}]
  %s1 = inlined_call_operand.hbm [shape: f32[2,16,32], index: 1, kind: input, shape index: {}]
  %s2 = inlined_call_operand.hbm [shape: f32[32,32], index: 2, kind: input, shape index: {}]
  %s3 = inlined_call_operand.vmem [shape: f32[1,32], index: 3, kind: input, shape index: {}]
  %s4 = inlined_call_operand.hbm [shape: f32[32,64], index: 4, kind: input, shape index: {}]
  %s5 = inlined_call_operand.vmem [shape: f32[1,64], index: 5, kind: input, shape index: {}]
  %s6 = inlined_call_operand.hbm [shape: f32[32,32], index: 6, kind: input, shape index: {}]
  %s7 = inlined_call_operand.vmem [shape: f32[1,32], index: 7, kind: input, shape index: {}]
  %s8 = inlined_call_operand.hbm [shape: f32[2,16,32], index: 8, kind: output, shape index: {}]
  %s9 = sld [smem:[#allocation0]]
  $region97: #{tpu_custom_call.1} parent=0
    _
  %s11 = ssub.s32 1, %s9
  %s12 = scalar_select 0, %s11, %s9
  $region1: #{tpu_custom_call.1} parent=0
    #allocation6 [shape = 'u8[8192]{0}', space=vmem, size = 0x2000, scoped, tag = 'input window, operand 0']
    #allocation7 [shape = 's32[2]{0}', space=sflag, size = 0x8, scoped, tag = 'scoped memory for tpu_custom_call.1']
    #allocation8 [shape = 's32[2]{0}', space=sflag, size = 0x8, scoped, tag = 'scoped memory for tpu_custom_call.1']
    #allocation9 [shape = 'u8[8192]{0}', space=vmem, size = 0x2000, scoped, tag = 'input window, operand 1']
    #allocation10 [shape = 's32[2]{0}', space=sflag, size = 0x8, scoped, tag = 'scoped memory for tpu_custom_call.1']
    #allocation11 [shape = 'u8[16384]{0}', space=vmem, size = 0x4000, scoped, tag = 'input window, operand 2, single buffered']
    #allocation12 [shape = 'u8[16384]{0}', space=vmem, size = 0x4000, scoped, tag = 'input window, operand 4, single buffered']
    #allocation13 [shape = 's32[1]{0}', space=sflag, size = 0x4, scoped, tag = 'scoped memory for tpu_custom_call.1']
    #allocation14 [shape = 'u8[16384]{0}', space=vmem, size = 0x4000, scoped, tag = 'input window, operand 6, single buffered']
    #allocation15 [shape = 'u8[8192]{0}', space=vmem, size = 0x2000, scoped, tag = 'output window, operand 0']
    %13 = vsyncpa [#allocation7], 0
    %s14 = scalar_lea.sflag [#allocation7], 1
    %15 = vsyncpa %s14, 0
    %16 = vsyncpa [#allocation10], 0
    %s17 = scalar_lea.sflag [#allocation10], 1
    %18 = vsyncpa %s17, 0
    %19 = vsyncpa [#allocation13], 0
    %20 = vsyncpa [#allocation8], 0
    %s21 = scalar_lea.sflag [#allocation8], 1
    %22 = vsyncpa %s21, 0
    loop: start=0, step=1, limit=10
    $region2: #{tpu_custom_call.1} parent=1 // loop_pre_header
      _
    $region3: #{tpu_custom_call.1} parent=1 // loop_header
      %s24 = sphi 0, %s28
      %p25 = scmp.ge.s32.totalorder %s24, 10
      %s31 = sphi 0, %s50
      %s32 = sphi 0, %s46
      %s33 = sphi 0, %s42
      %s34 = sphi 0, %s31
      %s35 = sphi 0, %s32
      %s36 = sphi 0, %s33
      %s37 = sphi 0, %s34
      %s38 = sphi 0, %s35
      %s39 = sphi 0, %s36
      %s55 = sphi 0, %s57
      %s58 = sphi 0, %s55
      %s59 = sphi 0, %s58
      %s75 = sphi 0, %s59
      %s83 = sphi 0, %s85
      %s86 = sphi 0, %s83
      %s87 = sphi 0, %s86
      %s103 = sphi 0, %s87
      %s107 = sphi 0, %s107
      %s109 = sphi 0, %s107
      %s110 = sphi 0, %s109
      %s124 = sphi 0, %s110
      %s128 = sphi 0, %s128
      %s130 = sphi 0, %s128
      %s131 = sphi 0, %s130
      %s145 = sphi 0, %s131
      %s149 = sphi 0, %s149
      %s151 = sphi 0, %s149
      %s152 = sphi 0, %s151
      %s166 = sphi 0, %s152
      %s170 = sphi 0, %s170
      %s172 = sphi 0, %s170
      %s173 = sphi 0, %s172
      %s187 = sphi 0, %s173
      %s191 = sphi 0, %s191
      %s193 = sphi 0, %s191
      %s194 = sphi 0, %s193
      %s208 = sphi 0, %s194
      %s212 = sphi 0, %s212
      %s214 = sphi 0, %s212
      %s215 = sphi 0, %s214
      %s229 = sphi 0, %s215
      %s237 = sphi 0, %s239
      %s240 = sphi 0, %s237
      %s241 = sphi 0, %s240
      %s257 = sphi 0, %s241
    $region4: #{tpu_custom_call.1} parent=1 // loop_header_branch
      %27 = sbr.rel (%p25) target = $region8
    $region5: #{tpu_custom_call.1} parent=1 // loop_body
      %s29 = ssub.s32 %s24, 1
      %s30 = ssub.s32 %s24, 2
      %s40 = sadd.s32 1, %s33
      %p41 = scmp.ge.s32.totalorder %s40, 2
      %s42 = scalar_select %p41, 0, %s40
      %s43 = sadd.s32 1, %s32
      %s44 = scalar_select %p41, %s43, %s32
      %p45 = scmp.ge.s32.totalorder %s44, 2
      %s46 = scalar_select %p45, 0, %s44
      %s47 = sadd.s32 1, %s31
      %s48 = scalar_select %p45, %s47, %s31
      %p49 = scmp.ge.s32.totalorder %s48, 2
      %s50 = scalar_select %p49, 0, %s48
      %s51 = ssub.s32 %s31, %s50
      %s52 = ssub.s32 %s32, %s46
      %s53 = sor.u32 %s51, %s52
      %p54 = scmp.eq.s32.totalorder %s53, 0
      %s56 = sadd.s32 %s55, 1
      %s57 = scalar_select %p54, %s55, %s56
      %p60 = pneg %p54
      %p61 = scmp.eq.s32.totalorder %s24, 7
      %p62 = por %p60, %p61
      %p63 = scmp.ne.s32.totalorder %s55, %s58
      %p64 = scmp.eq.s32.totalorder %s24, 0
      %p65 = por %p63, %p64
      %p66 = scmp.ne.s32.totalorder %s55, %s58
      %p67 = scmp.eq.s32.totalorder %s29, 7
      %p68 = por %p66, %p67
      %p69 = scmp.ne.s32.totalorder %s58, %s59
      %p70 = scmp.eq.s32.totalorder %s29, 0
      %p71 = por %p69, %p70
      %p72 = scmp.ne.s32.totalorder %s58, %s59
      %p73 = scmp.eq.s32.totalorder %s30, 7
      %p74 = por %p72, %p73
      %p76 = scmp.ne.s32.totalorder %s59, %s75
      %p77 = scmp.eq.s32.totalorder %s30, 0
      %p78 = por %p76, %p77
      %s79 = ssub.s32 %s31, %s50
      %s80 = ssub.s32 %s33, %s42
      %s81 = sor.u32 %s79, %s80
      %p82 = scmp.eq.s32.totalorder %s81, 0
      %s84 = sadd.s32 %s83, 1
      %s85 = scalar_select %p82, %s83, %s84
      %p88 = pneg %p82
      %p89 = scmp.eq.s32.totalorder %s24, 7
      %p90 = por %p88, %p89
      %p91 = scmp.ne.s32.totalorder %s83, %s86
      %p92 = scmp.eq.s32.totalorder %s24, 0
      %p93 = por %p91, %p92
      %p94 = scmp.ne.s32.totalorder %s83, %s86
      %p95 = scmp.eq.s32.totalorder %s29, 7
      %p96 = por %p94, %p95
      %p97 = scmp.ne.s32.totalorder %s86, %s87
      %p98 = scmp.eq.s32.totalorder %s29, 0
      %p99 = por %p97, %p98
      %p100 = scmp.ne.s32.totalorder %s86, %s87
      %p101 = scmp.eq.s32.totalorder %s30, 7
      %p102 = por %p100, %p101
      %p104 = scmp.ne.s32.totalorder %s87, %s103
      %p105 = scmp.eq.s32.totalorder %s30, 0
      %p106 = por %p104, %p105
      %s108 = sadd.s32 %s107, 1
      %p111 = scmp.eq.s32.totalorder %s24, 7
      %p112 = scmp.ne.s32.totalorder %s107, %s109
      %p113 = scmp.eq.s32.totalorder %s24, 0
      %p114 = por %p112, %p113
      %p115 = scmp.ne.s32.totalorder %s107, %s109
      %p116 = scmp.eq.s32.totalorder %s29, 7
      %p117 = por %p115, %p116
      %p118 = scmp.ne.s32.totalorder %s109, %s110
      %p119 = scmp.eq.s32.totalorder %s29, 0
      %p120 = por %p118, %p119
      %p121 = scmp.ne.s32.totalorder %s109, %s110
      %p122 = scmp.eq.s32.totalorder %s30, 7
      %p123 = por %p121, %p122
      %p125 = scmp.ne.s32.totalorder %s110, %s124
      %p126 = scmp.eq.s32.totalorder %s30, 0
      %p127 = por %p125, %p126
      %s129 = sadd.s32 %s128, 1
      %p132 = scmp.eq.s32.totalorder %s24, 7
      %p133 = scmp.ne.s32.totalorder %s128, %s130
      %p134 = scmp.eq.s32.totalorder %s24, 0
      %p135 = por %p133, %p134
      %p136 = scmp.ne.s32.totalorder %s128, %s130
      %p137 = scmp.eq.s32.totalorder %s29, 7
      %p138 = por %p136, %p137
      %p139 = scmp.ne.s32.totalorder %s130, %s131
      %p140 = scmp.eq.s32.totalorder %s29, 0
      %p141 = por %p139, %p140
      %p142 = scmp.ne.s32.totalorder %s130, %s131
      %p143 = scmp.eq.s32.totalorder %s30, 7
      %p144 = por %p142, %p143
      %p146 = scmp.ne.s32.totalorder %s131, %s145
      %p147 = scmp.eq.s32.totalorder %s30, 0
      %p148 = por %p146, %p147
      %s150 = sadd.s32 %s149, 1
      %p153 = scmp.eq.s32.totalorder %s24, 7
      %p154 = scmp.ne.s32.totalorder %s149, %s151
      %p155 = scmp.eq.s32.totalorder %s24, 0
      %p156 = por %p154, %p155
      %p157 = scmp.ne.s32.totalorder %s149, %s151
      %p158 = scmp.eq.s32.totalorder %s29, 7
      %p159 = por %p157, %p158
      %p160 = scmp.ne.s32.totalorder %s151, %s152
      %p161 = scmp.eq.s32.totalorder %s29, 0
      %p162 = por %p160, %p161
      %p163 = scmp.ne.s32.totalorder %s151, %s152
      %p164 = scmp.eq.s32.totalorder %s30, 7
      %p165 = por %p163, %p164
      %p167 = scmp.ne.s32.totalorder %s152, %s166
      %p168 = scmp.eq.s32.totalorder %s30, 0
      %p169 = por %p167, %p168
      %s171 = sadd.s32 %s170, 1
      %p174 = scmp.eq.s32.totalorder %s24, 7
      %p175 = scmp.ne.s32.totalorder %s170, %s172
      %p176 = scmp.eq.s32.totalorder %s24, 0
      %p177 = por %p175, %p176
      %p178 = scmp.ne.s32.totalorder %s170, %s172
      %p179 = scmp.eq.s32.totalorder %s29, 7
      %p180 = por %p178, %p179
      %p181 = scmp.ne.s32.totalorder %s172, %s173
      %p182 = scmp.eq.s32.totalorder %s29, 0
      %p183 = por %p181, %p182
      %p184 = scmp.ne.s32.totalorder %s172, %s173
      %p185 = scmp.eq.s32.totalorder %s30, 7
      %p186 = por %p184, %p185
      %p188 = scmp.ne.s32.totalorder %s173, %s187
      %p189 = scmp.eq.s32.totalorder %s30, 0
      %p190 = por %p188, %p189
      %s192 = sadd.s32 %s191, 1
      %p195 = scmp.eq.s32.totalorder %s24, 7
      %p196 = scmp.ne.s32.totalorder %s191, %s193
      %p197 = scmp.eq.s32.totalorder %s24, 0
      %p198 = por %p196, %p197
      %p199 = scmp.ne.s32.totalorder %s191, %s193
      %p200 = scmp.eq.s32.totalorder %s29, 7
      %p201 = por %p199, %p200
      %p202 = scmp.ne.s32.totalorder %s193, %s194
      %p203 = scmp.eq.s32.totalorder %s29, 0
      %p204 = por %p202, %p203
      %p205 = scmp.ne.s32.totalorder %s193, %s194
      %p206 = scmp.eq.s32.totalorder %s30, 7
      %p207 = por %p205, %p206
      %p209 = scmp.ne.s32.totalorder %s194, %s208
      %p210 = scmp.eq.s32.totalorder %s30, 0
      %p211 = por %p209, %p210
      %s213 = sadd.s32 %s212, 1
      %p216 = scmp.eq.s32.totalorder %s24, 7
      %p217 = scmp.ne.s32.totalorder %s212, %s214
      %p218 = scmp.eq.s32.totalorder %s24, 0
      %p219 = por %p217, %p218
      %p220 = scmp.ne.s32.totalorder %s212, %s214
      %p221 = scmp.eq.s32.totalorder %s29, 7
      %p222 = por %p220, %p221
      %p223 = scmp.ne.s32.totalorder %s214, %s215
      %p224 = scmp.eq.s32.totalorder %s29, 0
      %p225 = por %p223, %p224
      %p226 = scmp.ne.s32.totalorder %s214, %s215
      %p227 = scmp.eq.s32.totalorder %s30, 7
      %p228 = por %p226, %p227
      %p230 = scmp.ne.s32.totalorder %s215, %s229
      %p231 = scmp.eq.s32.totalorder %s30, 0
      %p232 = por %p230, %p231
      %s233 = ssub.s32 %s31, %s50
      %s234 = ssub.s32 %s32, %s46
      %s235 = sor.u32 %s233, %s234
      %p236 = scmp.eq.s32.totalorder %s235, 0
      %s238 = sadd.s32 %s237, 1
      %s239 = scalar_select %p236, %s237, %s238
      %p242 = pneg %p236
      %p243 = scmp.eq.s32.totalorder %s24, 7
      %p244 = por %p242, %p243
      %p245 = scmp.ne.s32.totalorder %s237, %s240
      %p246 = scmp.eq.s32.totalorder %s24, 0
      %p247 = por %p245, %p246
      %p248 = scmp.ne.s32.totalorder %s237, %s240
      %p249 = scmp.eq.s32.totalorder %s29, 7
      %p250 = por %p248, %p249
      %p251 = scmp.ne.s32.totalorder %s240, %s241
      %p252 = scmp.eq.s32.totalorder %s29, 0
      %p253 = por %p251, %p252
      %p254 = scmp.ne.s32.totalorder %s240, %s241
      %p255 = scmp.eq.s32.totalorder %s30, 7
      %p256 = por %p254, %p255
      %p258 = scmp.ne.s32.totalorder %s241, %s257
      %p259 = scmp.eq.s32.totalorder %s30, 0
      %p260 = por %p258, %p259
      %p261 = scmp.le.s32.totalorder 1, %s24
      %p262 = scmp.lt.s32.totalorder %s24, 9
      %p263 = pnand %p261, %p262
      %p264 = pneg %p263
      // Predicated region
      $region9: #{tpu_custom_call.1} parent=5 // pred_check
        _
      $region10: #{tpu_custom_call.1} parent=5 // pred_check_branch
        %266 = sbr.rel (%p263) target = $region12
      $region11: #{tpu_custom_call.1} parent=5 // pred_region
        %s267 = ssub.s32 %s24, 1
        // Predicated region
        $region13: #{tpu_custom_call.1} parent=11 // pred_check
          %p268 = pneg %p120
        $region14: #{tpu_custom_call.1} parent=11 // pred_check_branch
          %270 = sbr.rel (%p268) target = $region16
        $region15: #{tpu_custom_call.1} parent=11 // pred_region
          %272 = vsyncadd [#allocation10], 0
          %s273 = sshll.u32 %s2, 4
          %s274 = int_to_ptr.hbm [resolvable:$true] %s273
          %s275 = sshll.u32 [#allocation11], 4
          %s276 = int_to_ptr.vmem [resolvable:$true] %s275
          %281 = dma.hbm_to_vmem [thread:$0]  %s274, 512, %s276, [#allocation10], 128, 128, 8
        $region16: #{tpu_custom_call.1} parent=11 // pred_fallthru
          _
        // Predicated region
        $region17: #{tpu_custom_call.1} parent=11 // pred_check
          %p282 = pneg %p141
        $region18: #{tpu_custom_call.1} parent=11 // pred_check_branch
          %284 = sbr.rel (%p282) target = $region20
        $region19: #{tpu_custom_call.1} parent=11 // pred_region
          _
        $region20: #{tpu_custom_call.1} parent=11 // pred_fallthru
          _
        // Predicated region
        $region21: #{tpu_custom_call.1} parent=11 // pred_check
          %p285 = pneg %p162
        $region22: #{tpu_custom_call.1} parent=11 // pred_check_branch
          %287 = sbr.rel (%p285) target = $region24
        $region23: #{tpu_custom_call.1} parent=11 // pred_region
          %289 = vsyncadd [#allocation13], 0
          %s290 = sshll.u32 %s4, 4
          %s291 = int_to_ptr.hbm [resolvable:$true] %s290
          %s292 = sshll.u32 [#allocation12], 4
          %s293 = int_to_ptr.vmem [resolvable:$true] %s292
          %298 = dma.hbm_to_vmem [thread:$0]  %s291, 512, %s293, [#allocation13], 128, 128, 8
        $region24: #{tpu_custom_call.1} parent=11 // pred_fallthru
          _
        // Predicated region
        $region25: #{tpu_custom_call.1} parent=11 // pred_check
          %p299 = pneg %p183
        $region26: #{tpu_custom_call.1} parent=11 // pred_check_branch
          %301 = sbr.rel (%p299) target = $region28
        $region27: #{tpu_custom_call.1} parent=11 // pred_region
          _
        $region28: #{tpu_custom_call.1} parent=11 // pred_fallthru
          _
        // Predicated region
        $region29: #{tpu_custom_call.1} parent=11 // pred_check
          %p302 = pneg %p204
        $region30: #{tpu_custom_call.1} parent=11 // pred_check_branch
          %304 = sbr.rel (%p302) target = $region32
        $region31: #{tpu_custom_call.1} parent=11 // pred_region
          %306 = vsyncadd [#allocation13], 0
          %s307 = sshll.u32 %s6, 4
          %s308 = int_to_ptr.hbm [resolvable:$true] %s307
          %s309 = sshll.u32 [#allocation14], 4
          %s310 = int_to_ptr.vmem [resolvable:$true] %s309
          %315 = dma.hbm_to_vmem [thread:$0]  %s308, 512, %s310, [#allocation13], 128, 128, 8
        $region32: #{tpu_custom_call.1} parent=11 // pred_fallthru
          _
        // Predicated region
        $region33: #{tpu_custom_call.1} parent=11 // pred_check
          %p316 = pneg %p225
        $region34: #{tpu_custom_call.1} parent=11 // pred_check_branch
          %318 = sbr.rel (%p316) target = $region36
        $region35: #{tpu_custom_call.1} parent=11 // pred_region
          _
        $region36: #{tpu_custom_call.1} parent=11 // pred_fallthru
          _
      $region12: #{tpu_custom_call.1} parent=5 // pred_fallthru
        _
      %p319 = scmp.lt.s32.totalorder %s24, 8
      // Predicated region
      $region37: #{tpu_custom_call.1} parent=5 // pred_check
        %p320 = pneg %p319
      $region38: #{tpu_custom_call.1} parent=5 // pred_check_branch
        %322 = sbr.rel (%p320) target = $region40
      $region39: #{tpu_custom_call.1} parent=5 // pred_region
        // Predicated region
        $region41: #{tpu_custom_call.1} parent=39 // pred_check
          %p323 = pneg %p65
        $region42: #{tpu_custom_call.1} parent=39 // pred_check_branch
          %325 = sbr.rel (%p323) target = $region44
        $region43: #{tpu_custom_call.1} parent=39 // pred_region
          %s326 = sand.u32 %s55, 1
          %s327 = scalar_lea.sflag [#allocation7], %s326
          %s328 = sand.u32 %s55, 1
          %s329 = smul.addr %s328, 8
          %s330 = scalar_lea.vmem [#allocation6], %s329
          %332 = vsyncadd %s327, 0
          %s333 = smul.addr %s31, 2
          %s334 = sadd.s32 %s32, %s333
          %s335 = smul.addr %s334, 8
          %s336 = scalar_lea.hbm %s0, %s335
          %s338 = sshll.u32 %s336, 4
          %s339 = int_to_ptr.hbm [resolvable:$true] %s338
          %s340 = sshll.u32 %s330, 4
          %s341 = int_to_ptr.vmem [resolvable:$true] %s340
          %343 = dma.hbm_to_vmem [thread:$0]  %s339, 128, %s341, %s327
        $region44: #{tpu_custom_call.1} parent=39 // pred_fallthru
          _
        // Predicated region
        $region45: #{tpu_custom_call.1} parent=39 // pred_check
          %p344 = pneg %p93
        $region46: #{tpu_custom_call.1} parent=39 // pred_check_branch
          %346 = sbr.rel (%p344) target = $region48
        $region47: #{tpu_custom_call.1} parent=39 // pred_region
          %s347 = sand.u32 %s24, 1
          %s348 = scalar_lea.sflag [#allocation10], %s347
          %s349 = sand.u32 %s83, 1
          %s350 = smul.addr %s349, 8
          %s351 = scalar_lea.vmem [#allocation9], %s350
          %353 = vsyncadd %s348, 0
          %s354 = smul.addr %s31, 2
          %s355 = sadd.s32 %s33, %s354
          %s356 = smul.addr %s355, 8
          %s357 = scalar_lea.hbm %s1, %s356
          %s359 = sshll.u32 %s357, 4
          %s360 = int_to_ptr.hbm [resolvable:$true] %s359
          %s361 = sshll.u32 %s351, 4
          %s362 = int_to_ptr.vmem [resolvable:$true] %s361
          %364 = dma.hbm_to_vmem [thread:$0]  %s360, 128, %s362, %s348
        $region48: #{tpu_custom_call.1} parent=39 // pred_fallthru
          _
      $region40: #{tpu_custom_call.1} parent=5 // pred_fallthru
        _
      %p365 = scmp.le.s32.totalorder 1, %s24
      %p366 = scmp.lt.s32.totalorder %s24, 9
      %p367 = pnand %p365, %p366
      %p368 = pneg %p367
      // Predicated region
      $region49: #{tpu_custom_call.1} parent=5 // pred_check
        _
      $region50: #{tpu_custom_call.1} parent=5 // pred_check_branch
        %370 = sbr.rel (%p367) target = $region52
      $region51: #{tpu_custom_call.1} parent=5 // pred_region
        %s371 = ssub.s32 %s24, 1
        %s372 = sand.u32 %s58, 1
        %s373 = scalar_lea.sflag [#allocation7], %s372
        %s374 = sand.u32 %s58, 1
        %s375 = smul.addr %s374, 8
        %s376 = scalar_lea.vmem [#allocation6], %s375
        // Predicated region
        $region53: #{tpu_custom_call.1} parent=51 // pred_check
          %p377 = pneg %p71
        $region54: #{tpu_custom_call.1} parent=51 // pred_check_branch
          %379 = sbr.rel (%p377) target = $region56
        $region55: #{tpu_custom_call.1} parent=51 // pred_region
          %381 = dma.done %s373, 128
        $region56: #{tpu_custom_call.1} parent=51 // pred_fallthru
          _
        %s382 = sand.u32 %s29, 1
        %s383 = scalar_lea.sflag [#allocation10], %s382
        %s384 = sand.u32 %s86, 1
        %s385 = smul.addr %s384, 8
        %s386 = scalar_lea.vmem [#allocation9], %s385
        // Predicated region
        $region57: #{tpu_custom_call.1} parent=51 // pred_check
          %p387 = pneg %p99
        $region58: #{tpu_custom_call.1} parent=51 // pred_check_branch
          %389 = sbr.rel (%p387) target = $region60
        $region59: #{tpu_custom_call.1} parent=51 // pred_region
          %391 = dma.done %s383, 128
        $region60: #{tpu_custom_call.1} parent=51 // pred_fallthru
          _
        // Predicated region
        $region61: #{tpu_custom_call.1} parent=51 // pred_check
          %p392 = pneg %p120
        $region62: #{tpu_custom_call.1} parent=51 // pred_check_branch
          %394 = sbr.rel (%p392) target = $region64
        $region63: #{tpu_custom_call.1} parent=51 // pred_region
          %396 = dma.done [#allocation10], 512
        $region64: #{tpu_custom_call.1} parent=51 // pred_fallthru
          _
        // Predicated region
        $region65: #{tpu_custom_call.1} parent=51 // pred_check
          %p397 = pneg %p162
        $region66: #{tpu_custom_call.1} parent=51 // pred_check_branch
          %399 = sbr.rel (%p397) target = $region68
        $region67: #{tpu_custom_call.1} parent=51 // pred_region
          %401 = dma.done [#allocation13], 512
        $region68: #{tpu_custom_call.1} parent=51 // pred_fallthru
          _
        // Predicated region
        $region69: #{tpu_custom_call.1} parent=51 // pred_check
          %p402 = pneg %p204
        $region70: #{tpu_custom_call.1} parent=51 // pred_check_branch
          %404 = sbr.rel (%p402) target = $region72
        $region71: #{tpu_custom_call.1} parent=51 // pred_region
          %406 = dma.done [#allocation13], 512
        $region72: #{tpu_custom_call.1} parent=51 // pred_fallthru
          _
        %s407 = sand.u32 %s58, 1
        %s408 = scalar_lea.sflag [#allocation7], %s407
        %s409 = sand.u32 %s58, 1
        %s410 = smul.addr %s409, 8
        %s411 = scalar_lea.vmem [#allocation6], %s410
        %p412 = pneg %p71
        %p413 = pneg %p68
        %s414 = sand.u32 %s29, 1
        %s415 = scalar_lea.sflag [#allocation10], %s414
        %s416 = sand.u32 %s86, 1
        %s417 = smul.addr %s416, 8
        %s418 = scalar_lea.vmem [#allocation9], %s417
        %p419 = pneg %p99
        %p420 = pneg %p96
        %p421 = pneg %p120
        %p422 = pneg %p117
        %p423 = pneg %p141
        %p424 = pneg %p138
        %p425 = pneg %p162
        %p426 = pneg %p159
        %p427 = pneg %p183
        %p428 = pneg %p180
        %p429 = pneg %p204
        %p430 = pneg %p201
        %p431 = pneg %p225
        %p432 = pneg %p222
        %p433 = pneg %p253
        %p434 = pneg %p250
        %s435 = sand.u32 %s240, 1
        %s436 = scalar_lea.sflag [#allocation8], %s435
        %s437 = sand.u32 %s240, 1
        %s438 = smul.addr %s437, 8
        %s439 = scalar_lea.vmem [#allocation15], %s438
        %p440 = scmp.eq.s32.totalorder %s36, 0
        // Predicated region
        $region73: #{tpu_custom_call.1} parent=51 // pred_check
          %p441 = pneg %p440
        $region74: #{tpu_custom_call.1} parent=51 // pred_check_branch
          %443 = sbr.rel (%p441) target = $region76
        $region75: #{tpu_custom_call.1} parent=51 // pred_region
          %v444 = vld [vmem:[%s376] sm:$0xff]
          %v445 = vld [vmem:[#allocation11] sm:$0xff]
          %v446 = vld [vmem:[#allocation11 + $0x8] sm:$0xff]
          %v447 = vld [vmem:[#allocation11 + $0x10] sm:$0xff]
          %v448 = vld [vmem:[#allocation11 + $0x18] sm:$0xff]
          %v449 = vld [vmem:[%s3] sm:$0x1]
          %v451 = vperm.slane %v449, 0
          %vm453 = vcmask 261120
          %v455 = vsel %vm453, %v444, 0
          %457 = vmatpush.msra.mxu0 0.0
          %458 = vmatpush.msra.mxu0 0.0
          %459 = vmatpush.msra.mxu0 0.0
          %460 = vmatpush.msra.mxu0 0.0
          %461 = vmatpush.msra.mxu0 0.0
          %462 = vmatpush.msra.mxu0 0.0
          %463 = vmatpush.msra.mxu0 0.0
          %464 = vmatpush.msra.mxu0 0.0
          %465 = vmatpush.msra.mxu0 0.0
          %466 = vmatpush.msra.mxu0 0.0
          %467 = vmatpush.msra.mxu0 0.0
          %468 = vmatpush.msra.mxu0 0.0
          %469 = vmatpush.msra.mxu0 %v448
          %470 = vmatpush.msra.mxu0 %v447
          %471 = vmatpush.msra.mxu0 %v446
          %472 = vmatpush.msra.mxu0 %v445
          %473 = vmatmul.f32.gmra.mxu0 %v455
          %v474 = vpop.f32.mrf.mxu0
          %v475 = vadd.f32 %v451, %v474
          %476 = vdwg.mxu0
          %477 = vst.msk [vmem:[#allocation2] sm:$0xff] %vm453, %v475
          %vm478 = vcmask 7168
          %479 = vst.msk [vmem:[#allocation3] sm:$0xff] %vm478, -inf
          %480 = vst.msk [vmem:[#allocation3 + $0x8] sm:$0xff] %vm478, -inf
          %481 = vst.msk [vmem:[#allocation3 + $0x10] sm:$0xff] %vm478, -inf
          %482 = vst.msk [vmem:[#allocation3 + $0x18] sm:$0xff] %vm478, -inf
          %483 = vst.msk [vmem:[#allocation4] sm:$0xff] %vm478, 0.0
          %484 = vst.msk [vmem:[#allocation4 + $0x8] sm:$0xff] %vm478, 0.0
          %485 = vst.msk [vmem:[#allocation4 + $0x10] sm:$0xff] %vm478, 0.0
          %486 = vst.msk [vmem:[#allocation4 + $0x18] sm:$0xff] %vm478, 0.0
          %487 = vst.msk [vmem:[#allocation5] sm:$0xff] %vm453, 0.0
        $region76: #{tpu_custom_call.1} parent=51 // pred_fallthru
          _
        %s488 = smul.u32 %s36, 8
        %s489 = smul.u32 %s35, 8
        %s490 = sadd.s32 %s489, 7
        %p491 = scmp.le.s32.totalorder %s488, %s490
        // Predicated region
        $region77: #{tpu_custom_call.1} parent=51 // pred_check
          %p492 = pneg %p491
        $region78: #{tpu_custom_call.1} parent=51 // pred_check_branch
          %494 = sbr.rel (%p492) target = $region80
        $region79: #{tpu_custom_call.1} parent=51 // pred_region
          %v495 = vld [vmem:[%s386] sm:$0xff]
          %v496 = vld [vmem:[#allocation12] sm:$0xff]
          %v497 = vld [vmem:[#allocation12 + $0x8] sm:$0xff]
          %v498 = vld [vmem:[#allocation12 + $0x10] sm:$0xff]
          %v499 = vld [vmem:[#allocation12 + $0x18] sm:$0xff]
          %v500 = vld [vmem:[%s5] sm:$0x1]
          %v502 = vperm.slane %v500, 0
          %vm504 = vcmask 261120
          %v506 = vsel %vm504, %v495, 0
          %508 = vmatpush.msra.mxu0 0.0
          %509 = vmatpush.msra.mxu0 0.0
          %510 = vmatpush.msra.mxu0 0.0
          %511 = vmatpush.msra.mxu0 0.0
          %512 = vmatpush.msra.mxu0 0.0
          %513 = vmatpush.msra.mxu0 0.0
          %514 = vmatpush.msra.mxu0 0.0
          %515 = vmatpush.msra.mxu0 0.0
          %516 = vmatpush.msra.mxu0 0.0
          %517 = vmatpush.msra.mxu0 0.0
          %518 = vmatpush.msra.mxu0 0.0
          %519 = vmatpush.msra.mxu0 0.0
          %520 = vmatpush.msra.mxu0 %v499
          %521 = vmatpush.msra.mxu0 %v498
          %522 = vmatpush.msra.mxu0 %v497
          %523 = vmatpush.msra.mxu0 %v496
          %524 = vmatmul.f32.gmra.mxu0 %v506
          %v525 = vpop.f32.mrf.mxu0
          %v526 = vadd.f32 %v502, %v525
          %527 = vdwg.mxu0
          %v528 = vld [vmem:[#allocation2] sm:$0xff]
          %v529 = vlaneseq
          %v530 = vshrl.u32 %v529, 7
          %v531 = vstv %s489
          %v532 = vadd.s32 %v531, %v530
          %v533 = vlaneseq
          %v534 = vand.u32 %v533, 127
          %v535 = vstv %s488
          %v536 = vadd.s32 %v535, %v534
          %vm537 = vcmp.le.s32.totalorder %v536, %v532
          %vm538 = vcmask 64512
          %v540 = vsel %vm538, %v528, 0
          %v543 = vsel %vm538, %v526, 0
          %545 = vmatpush.xpose.msra.mxu0 0.0
          %546 = vmatpush.xpose.msra.mxu0 0.0
          %547 = vmatpush.xpose.msra.mxu0 0.0
          %548 = vmatpush.xpose.msra.mxu0 0.0
          %549 = vmatpush.xpose.msra.mxu0 0.0
          %550 = vmatpush.xpose.msra.mxu0 0.0
          %551 = vmatpush.xpose.msra.mxu0 0.0
          %552 = vmatpush.xpose.msra.mxu0 0.0
          %553 = vmatpush.xpose.msra.mxu0 0.0
          %554 = vmatpush.xpose.msra.mxu0 0.0
          %555 = vmatpush.xpose.msra.mxu0 0.0
          %556 = vmatpush.xpose.msra.mxu0 0.0
          %557 = vmatpush.xpose.msra.mxu0 0.0
          %558 = vmatpush.xpose.msra.mxu0 0.0
          %559 = vmatpush.xpose.msra.mxu0 0.0
          %560 = vmatpush.xpose.msra.mxu0 %v543
          %561 = vmatmul.f32.gmra.mxu0 %v540
          %v562 = vpop.f32.mrf.mxu0
          %v563 = vadd.f32 0.0, %v562
          %564 = vdwg.mxu0
          %v565 = vsel %vm537, %v563, -inf
          %v566 = vld [vmem:[#allocation3] sm:$0xff]
          %v567 = vsel %vm538, %v565, -inf
          %568 = vmax.xlane.f32.xlu0 %v567
          %v569 = vpop.xlane.xlu0 %568
          %v570 = vmax.f32 %v566, %v569
          %v571 = vsub.f32 %v566, %v570
          %v572 = vmul.f32 %v571, 1.442695
          %v573 = vpow.pop %v572
          %575 = vset.pattern.permute.xlu0 0
          %576 = vperm.xlu0 %575, %v570
          %v577 = vpop.permute.xlu0 %576
          %v579 = vsub.f32 %v565, %v577
          %v580 = vmul.f32 %v579, 1.442695
          %v581 = vpow.pop %v580
          %v582 = vld [vmem:[#allocation4] sm:$0xff]
          %v583 = vmul.f32 %v573, %v582
          %v584 = vsel %vm538, %v581, 0.0
          %585 = vadd.xlane.f32.xlu0 %v584
          %v586 = vpop.xlane.xlu0 %585
          %v587 = vadd.f32 %v583, %v586
          %vm588 = vcmask 7168
          %589 = vst.msk [vmem:[#allocation4] sm:$0xff] %vm588, %v587
          %590 = vrot.lane.b32.xlu0 %v526, 96
          %v591 = vpop.permute.xlu0 %590
          %v594 = vsel %vm538, %v581, 0
          %596 = vmatpush.msra.mxu0 0.0
          %597 = vmatpush.msra.mxu0 0.0
          %598 = vmatpush.msra.mxu0 0.0
          %599 = vmatpush.msra.mxu0 0.0
          %600 = vmatpush.msra.mxu0 0.0
          %601 = vmatpush.msra.mxu0 0.0
          %602 = vmatpush.msra.mxu0 0.0
          %603 = vmatpush.msra.mxu0 0.0
          %604 = vmatpush.msra.mxu0 0.0
          %605 = vmatpush.msra.mxu0 0.0
          %606 = vmatpush.msra.mxu0 0.0
          %607 = vmatpush.msra.mxu0 0.0
          %608 = vmatpush.msra.mxu0 0.0
          %609 = vmatpush.msra.mxu0 0.0
          %610 = vmatpush.msra.mxu0 0.0
          %611 = vmatpush.msra.mxu0 %v591
          %612 = vmatmul.f32.gmra.mxu0 %v594
          %v613 = vpop.f32.mrf.mxu0
          %v614 = vadd.f32 0.0, %v613
          %615 = vdwg.mxu0
          %v616 = vld [vmem:[#allocation5] sm:$0xff]
          %618 = vset.pattern.permute.xlu0 0
          %619 = vperm.xlu0 %618, %v573
          %v620 = vpop.permute.xlu0 %619
          %v622 = vmul.f32 %v620, %v616
          %v623 = vadd.f32 %v622, %v614
          %624 = vst.msk [vmem:[#allocation5] sm:$0xff] %vm538, %v623
          %625 = vst.msk [vmem:[#allocation3] sm:$0xff] %vm588, %v570
          %626 = vrot.lane.b32.xlu0 %v528, 120
          %v627 = vpop.permute.xlu0 %626
          %628 = vrot.lane.b32.xlu0 %v526, 120
          %v629 = vpop.permute.xlu0 %628
          %v630 = vsel %vm538, %v627, 0
          %v632 = vsel %vm538, %v629, 0
          %634 = vmatpush.xpose.msra.mxu0 0.0
          %635 = vmatpush.xpose.msra.mxu0 0.0
          %636 = vmatpush.xpose.msra.mxu0 0.0
          %637 = vmatpush.xpose.msra.mxu0 0.0
          %638 = vmatpush.xpose.msra.mxu0 0.0
          %639 = vmatpush.xpose.msra.mxu0 0.0
          %640 = vmatpush.xpose.msra.mxu0 0.0
          %641 = vmatpush.xpose.msra.mxu0 0.0
          %642 = vmatpush.xpose.msra.mxu0 0.0
          %643 = vmatpush.xpose.msra.mxu0 0.0
          %644 = vmatpush.xpose.msra.mxu0 0.0
          %645 = vmatpush.xpose.msra.mxu0 0.0
          %646 = vmatpush.xpose.msra.mxu0 0.0
          %647 = vmatpush.xpose.msra.mxu0 0.0
          %648 = vmatpush.xpose.msra.mxu0 0.0
          %649 = vmatpush.xpose.msra.mxu0 %v632
          %650 = vmatmul.f32.gmra.mxu0 %v630
          %v651 = vpop.f32.mrf.mxu0
          %v652 = vadd.f32 0.0, %v651
          %653 = vdwg.mxu0
          %v654 = vsel %vm537, %v652, -inf
          %s655 = scalar_lea.vmem [#allocation3], 8
          %v656 = vld [vmem:[%s655] sm:$0xff]
          %v657 = vsel %vm538, %v654, -inf
          %658 = vmax.xlane.f32.xlu0 %v657
          %v659 = vpop.xlane.xlu0 %658
          %v660 = vmax.f32 %v656, %v659
          %v661 = vsub.f32 %v656, %v660
          %v662 = vmul.f32 %v661, 1.442695
          %v663 = vpow.pop %v662
          %665 = vset.pattern.permute.xlu0 0
          %666 = vperm.xlu0 %665, %v660
          %v667 = vpop.permute.xlu0 %666
          %v669 = vsub.f32 %v654, %v667
          %v670 = vmul.f32 %v669, 1.442695
          %v671 = vpow.pop %v670
          %s672 = scalar_lea.vmem [#allocation4], 8
          %v673 = vld [vmem:[%s672] sm:$0xff]
          %v674 = vmul.f32 %v663, %v673
          %v675 = vsel %vm538, %v671, 0.0
          %676 = vadd.xlane.f32.xlu0 %v675
          %v677 = vpop.xlane.xlu0 %676
          %v678 = vadd.f32 %v674, %v677
          %679 = vst.msk [vmem:[%s672] sm:$0xff] %vm588, %v678
          %680 = vrot.lane.b32.xlu0 %v526, 88
          %v681 = vpop.permute.xlu0 %680
          %v684 = vsel %vm538, %v671, 0
          %686 = vmatpush.msra.mxu0 0.0
          %687 = vmatpush.msra.mxu0 0.0
          %688 = vmatpush.msra.mxu0 0.0
          %689 = vmatpush.msra.mxu0 0.0
          %690 = vmatpush.msra.mxu0 0.0
          %691 = vmatpush.msra.mxu0 0.0
          %692 = vmatpush.msra.mxu0 0.0
          %693 = vmatpush.msra.mxu0 0.0
          %694 = vmatpush.msra.mxu0 0.0
          %695 = vmatpush.msra.mxu0 0.0
          %696 = vmatpush.msra.mxu0 0.0
          %697 = vmatpush.msra.mxu0 0.0
          %698 = vmatpush.msra.mxu0 0.0
          %699 = vmatpush.msra.mxu0 0.0
          %700 = vmatpush.msra.mxu0 0.0
          %701 = vmatpush.msra.mxu0 %v681
          %702 = vmatmul.f32.gmra.mxu0 %v684
          %v703 = vpop.f32.mrf.mxu0
          %v704 = vadd.f32 0.0, %v703
          %705 = vdwg.mxu0
          %v706 = vld [vmem:[#allocation5] sm:$0xff]
          %708 = vset.pattern.permute.xlu0 0
          %709 = vperm.xlu0 %708, %v663
          %v710 = vpop.permute.xlu0 %709
          %v712 = vmul.f32 %v710, %v706
          %714 = vrot.lane.b32.xlu0 %v704, 8
          %v715 = vpop.permute.xlu0 %714
          %v717 = vadd.f32 %v712, %v715
          %vm718 = vcmask 130112
          %719 = vst.msk [vmem:[#allocation5] sm:$0xff] %vm718, %v717
          %720 = vst.msk [vmem:[%s655] sm:$0xff] %vm588, %v660
          %721 = vrot.lane.b32.xlu0 %v528, 112
          %v722 = vpop.permute.xlu0 %721
          %723 = vrot.lane.b32.xlu0 %v526, 112
          %v724 = vpop.permute.xlu0 %723
          %v725 = vsel %vm538, %v722, 0
          %v727 = vsel %vm538, %v724, 0
          %729 = vmatpush.xpose.msra.mxu0 0.0
          %730 = vmatpush.xpose.msra.mxu0 0.0
          %731 = vmatpush.xpose.msra.mxu0 0.0
          %732 = vmatpush.xpose.msra.mxu0 0.0
          %733 = vmatpush.xpose.msra.mxu0 0.0
          %734 = vmatpush.xpose.msra.mxu0 0.0
          %735 = vmatpush.xpose.msra.mxu0 0.0
          %736 = vmatpush.xpose.msra.mxu0 0.0
          %737 = vmatpush.xpose.msra.mxu0 0.0
          %738 = vmatpush.xpose.msra.mxu0 0.0
          %739 = vmatpush.xpose.msra.mxu0 0.0
          %740 = vmatpush.xpose.msra.mxu0 0.0
          %741 = vmatpush.xpose.msra.mxu0 0.0
          %742 = vmatpush.xpose.msra.mxu0 0.0
          %743 = vmatpush.xpose.msra.mxu0 0.0
          %744 = vmatpush.xpose.msra.mxu0 %v727
          %745 = vmatmul.f32.gmra.mxu0 %v725
          %v746 = vpop.f32.mrf.mxu0
          %v747 = vadd.f32 0.0, %v746
          %748 = vdwg.mxu0
          %v749 = vsel %vm537, %v747, -inf
          %s750 = scalar_lea.vmem [#allocation3], 16
          %v751 = vld [vmem:[%s750] sm:$0xff]
          %v752 = vsel %vm538, %v749, -inf
          %753 = vmax.xlane.f32.xlu0 %v752
          %v754 = vpop.xlane.xlu0 %753
          %v755 = vmax.f32 %v751, %v754
          %v756 = vsub.f32 %v751, %v755
          %v757 = vmul.f32 %v756, 1.442695
          %v758 = vpow.pop %v757
          %760 = vset.pattern.permute.xlu0 0
          %761 = vperm.xlu0 %760, %v755
          %v762 = vpop.permute.xlu0 %761
          %v764 = vsub.f32 %v749, %v762
          %v765 = vmul.f32 %v764, 1.442695
          %v766 = vpow.pop %v765
          %s767 = scalar_lea.vmem [#allocation4], 16
          %v768 = vld [vmem:[%s767] sm:$0xff]
          %v769 = vmul.f32 %v758, %v768
          %v770 = vsel %vm538, %v766, 0.0
          %771 = vadd.xlane.f32.xlu0 %v770
          %v772 = vpop.xlane.xlu0 %771
          %v773 = vadd.f32 %v769, %v772
          %774 = vst.msk [vmem:[%s767] sm:$0xff] %vm588, %v773
          %775 = vrot.lane.b32.xlu0 %v526, 80
          %v776 = vpop.permute.xlu0 %775
          %v779 = vsel %vm538, %v766, 0
          %781 = vmatpush.msra.mxu0 0.0
          %782 = vmatpush.msra.mxu0 0.0
          %783 = vmatpush.msra.mxu0 0.0
          %784 = vmatpush.msra.mxu0 0.0
          %785 = vmatpush.msra.mxu0 0.0
          %786 = vmatpush.msra.mxu0 0.0
          %787 = vmatpush.msra.mxu0 0.0
          %788 = vmatpush.msra.mxu0 0.0
          %789 = vmatpush.msra.mxu0 0.0
          %790 = vmatpush.msra.mxu0 0.0
          %791 = vmatpush.msra.mxu0 0.0
          %792 = vmatpush.msra.mxu0 0.0
          %793 = vmatpush.msra.mxu0 0.0
          %794 = vmatpush.msra.mxu0 0.0
          %795 = vmatpush.msra.mxu0 0.0
          %796 = vmatpush.msra.mxu0 %v776
          %797 = vmatmul.f32.gmra.mxu0 %v779
          %v798 = vpop.f32.mrf.mxu0
          %v799 = vadd.f32 0.0, %v798
          %800 = vdwg.mxu0
          %v801 = vld [vmem:[#allocation5] sm:$0xff]
          %803 = vset.pattern.permute.xlu0 0
          %804 = vperm.xlu0 %803, %v758
          %v805 = vpop.permute.xlu0 %804
          %v807 = vmul.f32 %v805, %v801
          %809 = vrot.lane.b32.xlu0 %v799, 16
          %v810 = vpop.permute.xlu0 %809
          %v812 = vadd.f32 %v807, %v810
          %vm813 = vcmask 195712
          %814 = vst.msk [vmem:[#allocation5] sm:$0xff] %vm813, %v812
          %815 = vst.msk [vmem:[%s750] sm:$0xff] %vm588, %v755
          %816 = vrot.lane.b32.xlu0 %v528, 104
          %v817 = vpop.permute.xlu0 %816
          %818 = vrot.lane.b32.xlu0 %v526, 104
          %v819 = vpop.permute.xlu0 %818
          %v820 = vsel %vm538, %v817, 0
          %v822 = vsel %vm538, %v819, 0
          %824 = vmatpush.xpose.msra.mxu0 0.0
          %825 = vmatpush.xpose.msra.mxu0 0.0
          %826 = vmatpush.xpose.msra.mxu0 0.0
          %827 = vmatpush.xpose.msra.mxu0 0.0
          %828 = vmatpush.xpose.msra.mxu0 0.0
          %829 = vmatpush.xpose.msra.mxu0 0.0
          %830 = vmatpush.xpose.msra.mxu0 0.0
          %831 = vmatpush.xpose.msra.mxu0 0.0
          %832 = vmatpush.xpose.msra.mxu0 0.0
          %833 = vmatpush.xpose.msra.mxu0 0.0
          %834 = vmatpush.xpose.msra.mxu0 0.0
          %835 = vmatpush.xpose.msra.mxu0 0.0
          %836 = vmatpush.xpose.msra.mxu0 0.0
          %837 = vmatpush.xpose.msra.mxu0 0.0
          %838 = vmatpush.xpose.msra.mxu0 0.0
          %839 = vmatpush.xpose.msra.mxu0 %v822
          %840 = vmatmul.f32.gmra.mxu0 %v820
          %v841 = vpop.f32.mrf.mxu0
          %v842 = vadd.f32 0.0, %v841
          %843 = vdwg.mxu0
          %v844 = vsel %vm537, %v842, -inf
          %s845 = scalar_lea.vmem [#allocation3], 24
          %v846 = vld [vmem:[%s845] sm:$0xff]
          %v847 = vsel %vm538, %v844, -inf
          %848 = vmax.xlane.f32.xlu0 %v847
          %v849 = vpop.xlane.xlu0 %848
          %v850 = vmax.f32 %v846, %v849
          %v851 = vsub.f32 %v846, %v850
          %v852 = vmul.f32 %v851, 1.442695
          %v853 = vpow.pop %v852
          %855 = vset.pattern.permute.xlu0 0
          %856 = vperm.xlu0 %855, %v850
          %v857 = vpop.permute.xlu0 %856
          %v859 = vsub.f32 %v844, %v857
          %v860 = vmul.f32 %v859, 1.442695
          %v861 = vpow.pop %v860
          %s862 = scalar_lea.vmem [#allocation4], 24
          %v863 = vld [vmem:[%s862] sm:$0xff]
          %v864 = vmul.f32 %v853, %v863
          %v865 = vsel %vm538, %v861, 0.0
          %866 = vadd.xlane.f32.xlu0 %v865
          %v867 = vpop.xlane.xlu0 %866
          %v868 = vadd.f32 %v864, %v867
          %869 = vst.msk [vmem:[%s862] sm:$0xff] %vm588, %v868
          %870 = vrot.lane.b32.xlu0 %v526, 72
          %v871 = vpop.permute.xlu0 %870
          %v874 = vsel %vm538, %v861, 0
          %876 = vmatpush.msra.mxu0 0.0
          %877 = vmatpush.msra.mxu0 0.0
          %878 = vmatpush.msra.mxu0 0.0
          %879 = vmatpush.msra.mxu0 0.0
          %880 = vmatpush.msra.mxu0 0.0
          %881 = vmatpush.msra.mxu0 0.0
          %882 = vmatpush.msra.mxu0 0.0
          %883 = vmatpush.msra.mxu0 0.0
          %884 = vmatpush.msra.mxu0 0.0
          %885 = vmatpush.msra.mxu0 0.0
          %886 = vmatpush.msra.mxu0 0.0
          %887 = vmatpush.msra.mxu0 0.0
          %888 = vmatpush.msra.mxu0 0.0
          %889 = vmatpush.msra.mxu0 0.0
          %890 = vmatpush.msra.mxu0 0.0
          %891 = vmatpush.msra.mxu0 %v871
          %892 = vmatmul.f32.gmra.mxu0 %v874
          %v893 = vpop.f32.mrf.mxu0
          %v894 = vadd.f32 0.0, %v893
          %895 = vdwg.mxu0
          %v896 = vld [vmem:[#allocation5] sm:$0xff]
          %898 = vset.pattern.permute.xlu0 0
          %899 = vperm.xlu0 %898, %v853
          %v900 = vpop.permute.xlu0 %899
          %v902 = vmul.f32 %v900, %v896
          %904 = vrot.lane.b32.xlu0 %v894, 24
          %v905 = vpop.permute.xlu0 %904
          %v907 = vadd.f32 %v902, %v905
          %vm908 = vcmask 261312
          %909 = vst.msk [vmem:[#allocation5] sm:$0xff] %vm908, %v907
          %910 = vst.msk [vmem:[%s845] sm:$0xff] %vm588, %v850
        $region80: #{tpu_custom_call.1} parent=51 // pred_fallthru
          _
        %p911 = scmp.eq.s32.totalorder %s36, 1
        // Predicated region
        $region81: #{tpu_custom_call.1} parent=51 // pred_check
          %p912 = pneg %p911
        $region82: #{tpu_custom_call.1} parent=51 // pred_check_branch
          %914 = sbr.rel (%p912) target = $region84
        $region83: #{tpu_custom_call.1} parent=51 // pred_region
          %v915 = vld [vmem:[#allocation5] sm:$0xff]
          %v916 = vld [vmem:[#allocation4] sm:$0xff]
          %v917 = vrcp.pop %v916
          %v918 = vmul.f32 %v916, %v917
          %v919 = vsub.f32 1.0, %v918
          %v920 = vmul.f32 %v917, %v919
          %v921 = vadd.f32 %v917, %v920
          %vm922 = vweird.f32 %v916
          %vm923 = vweird.f32 %v917
          %vm924 = vmor %vm922, %vm923
          %v925 = vsel %vm924, %v917, %v921
          %v926 = vand.u32 2147483647, %v916
          %vm927 = vcmp.eq.f32.partialorder %v926, 8.507059e+37
          %v928 = vand.u32 %v916, 2147483648
          %v929 = vor.u32 1.1754944e-38, %v928
          %v930 = vsel %vm927, %v929, %v925
          %932 = vset.pattern.permute.xlu0 0
          %933 = vperm.xlu0 %932, %v930
          %v934 = vpop.permute.xlu0 %933
          %v936 = vmul.f32 %v915, %v934
          %vm937 = vcmask 64512
          %938 = vst.msk [vmem:[#allocation5] sm:$0xff] %vm937, %v936
          %v939 = vld [vmem:[#allocation5] sm:$0xff]
          %s940 = scalar_lea.vmem [#allocation4], 8
          %v941 = vld [vmem:[%s940] sm:$0xff]
          %v942 = vrcp.pop %v941
          %v943 = vmul.f32 %v941, %v942
          %v944 = vsub.f32 1.0, %v943
          %v945 = vmul.f32 %v942, %v944
          %v946 = vadd.f32 %v942, %v945
          %vm947 = vweird.f32 %v941
          %vm948 = vweird.f32 %v942
          %vm949 = vmor %vm947, %vm948
          %v950 = vsel %vm949, %v942, %v946
          %v951 = vand.u32 2147483647, %v941
          %vm952 = vcmp.eq.f32.partialorder %v951, 8.507059e+37
          %v953 = vand.u32 %v941, 2147483648
          %v954 = vor.u32 1.1754944e-38, %v953
          %v955 = vsel %vm952, %v954, %v950
          %957 = vset.pattern.permute.xlu0 0
          %958 = vperm.xlu0 %957, %v955
          %v959 = vpop.permute.xlu0 %958
          %v961 = vmul.f32 %v939, %v959
          %vm962 = vcmask 130112
          %963 = vst.msk [vmem:[#allocation5] sm:$0xff] %vm962, %v961
          %v964 = vld [vmem:[#allocation5] sm:$0xff]
          %s965 = scalar_lea.vmem [#allocation4], 16
          %v966 = vld [vmem:[%s965] sm:$0xff]
          %v967 = vrcp.pop %v966
          %v968 = vmul.f32 %v966, %v967
          %v969 = vsub.f32 1.0, %v968
          %v970 = vmul.f32 %v967, %v969
          %v971 = vadd.f32 %v967, %v970
          %vm972 = vweird.f32 %v966
          %vm973 = vweird.f32 %v967
          %vm974 = vmor %vm972, %vm973
          %v975 = vsel %vm974, %v967, %v971
          %v976 = vand.u32 2147483647, %v966
          %vm977 = vcmp.eq.f32.partialorder %v976, 8.507059e+37
          %v978 = vand.u32 %v966, 2147483648
          %v979 = vor.u32 1.1754944e-38, %v978
          %v980 = vsel %vm977, %v979, %v975
          %982 = vset.pattern.permute.xlu0 0
          %983 = vperm.xlu0 %982, %v980
          %v984 = vpop.permute.xlu0 %983
          %v986 = vmul.f32 %v964, %v984
          %vm987 = vcmask 195712
          %988 = vst.msk [vmem:[#allocation5] sm:$0xff] %vm987, %v986
          %v989 = vld [vmem:[#allocation5] sm:$0xff]
          %s990 = scalar_lea.vmem [#allocation4], 24
          %v991 = vld [vmem:[%s990] sm:$0xff]
          %v992 = vrcp.pop %v991
          %v993 = vmul.f32 %v991, %v992
          %v994 = vsub.f32 1.0, %v993
          %v995 = vmul.f32 %v992, %v994
          %v996 = vadd.f32 %v992, %v995
          %vm997 = vweird.f32 %v991
          %vm998 = vweird.f32 %v992
          %vm999 = vmor %vm997, %vm998
          %v1000 = vsel %vm999, %v992, %v996
          %v1001 = vand.u32 2147483647, %v991
          %vm1002 = vcmp.eq.f32.partialorder %v1001, 8.507059e+37
          %v1003 = vand.u32 %v991, 2147483648
          %v1004 = vor.u32 1.1754944e-38, %v1003
          %v1005 = vsel %vm1002, %v1004, %v1000
          %1007 = vset.pattern.permute.xlu0 0
          %1008 = vperm.xlu0 %1007, %v1005
          %v1009 = vpop.permute.xlu0 %1008
          %v1011 = vmul.f32 %v989, %v1009
          %vm1012 = vcmask 261312
          %1013 = vst.msk [vmem:[#allocation5] sm:$0xff] %vm1012, %v1011
          %v1014 = vld [vmem:[#allocation5] sm:$0xff]
          %v1015 = vld [vmem:[#allocation14] sm:$0xff]
          %v1016 = vld [vmem:[#allocation14 + $0x8] sm:$0xff]
          %v1017 = vld [vmem:[#allocation14 + $0x10] sm:$0xff]
          %v1018 = vld [vmem:[#allocation14 + $0x18] sm:$0xff]
          %v1019 = vld [vmem:[%s7] sm:$0x1]
          %v1021 = vperm.slane %v1019, 0
          %vm1023 = vcmask 261120
          %v1025 = vsel %vm1023, %v1014, 0
          %1027 = vmatpush.msra.mxu0 0.0
          %1028 = vmatpush.msra.mxu0 0.0
          %1029 = vmatpush.msra.mxu0 0.0
          %1030 = vmatpush.msra.mxu0 0.0
          %1031 = vmatpush.msra.mxu0 0.0
          %1032 = vmatpush.msra.mxu0 0.0
          %1033 = vmatpush.msra.mxu0 0.0
          %1034 = vmatpush.msra.mxu0 0.0
          %1035 = vmatpush.msra.mxu0 0.0
          %1036 = vmatpush.msra.mxu0 0.0
          %1037 = vmatpush.msra.mxu0 0.0
          %1038 = vmatpush.msra.mxu0 0.0
          %1039 = vmatpush.msra.mxu0 %v1018
          %1040 = vmatpush.msra.mxu0 %v1017
          %1041 = vmatpush.msra.mxu0 %v1016
          %1042 = vmatpush.msra.mxu0 %v1015
          %1043 = vmatmul.f32.gmra.mxu0 %v1025
          %v1044 = vpop.f32.mrf.mxu0
          %v1045 = vadd.f32 %v1021, %v1044
          %1046 = vdwg.mxu0
          %1047 = vst.msk [vmem:[%s439] sm:$0xff] %vm1023, %v1045
        $region84: #{tpu_custom_call.1} parent=51 // pred_fallthru
          _
        %s1048 = sand.u32 %s240, 1
        %s1049 = scalar_lea.sflag [#allocation8], %s1048
        %s1050 = sand.u32 %s240, 1
        %s1051 = smul.addr %s1050, 8
        %s1052 = scalar_lea.vmem [#allocation15], %s1051
        // Predicated region
        $region85: #{tpu_custom_call.1} parent=51 // pred_check
          %p1053 = pneg %p250
        $region86: #{tpu_custom_call.1} parent=51 // pred_check_branch
          %1055 = sbr.rel (%p1053) target = $region88
        $region87: #{tpu_custom_call.1} parent=51 // pred_region
          %1057 = vsyncadd %s1049, 0
          %s1058 = smul.addr %s34, 2
          %s1059 = sadd.s32 %s35, %s1058
          %s1060 = smul.addr %s1059, 8
          %s1061 = scalar_lea.hbm %s8, %s1060
          %s1063 = sshll.u32 %s1052, 4
          %s1064 = int_to_ptr.vmem [resolvable:$true] %s1063
          %s1065 = sshll.u32 %s1061, 4
          %s1066 = int_to_ptr.hbm [resolvable:$true] %s1065
          %1068 = dma.vmem_to_hbm [thread:$0]  %s1064, 128, %s1066, %s1049
        $region88: #{tpu_custom_call.1} parent=51 // pred_fallthru
          _
      $region52: #{tpu_custom_call.1} parent=5 // pred_fallthru
        _
      %p1069 = scmp.le.s32.totalorder 2, %s24
      // Predicated region
      $region89: #{tpu_custom_call.1} parent=5 // pred_check
        %p1070 = pneg %p1069
      $region90: #{tpu_custom_call.1} parent=5 // pred_check_branch
        %1072 = sbr.rel (%p1070) target = $region92
      $region91: #{tpu_custom_call.1} parent=5 // pred_region
        %s1073 = ssub.s32 %s24, 2
        // Predicated region
        $region93: #{tpu_custom_call.1} parent=91 // pred_check
          %p1074 = pneg %p256
        $region94: #{tpu_custom_call.1} parent=91 // pred_check_branch
          %1076 = sbr.rel (%p1074) target = $region96
        $region95: #{tpu_custom_call.1} parent=91 // pred_region
          %s1077 = sand.u32 %s241, 1
          %s1078 = scalar_lea.sflag [#allocation8], %s1077
          %s1079 = sand.u32 %s241, 1
          %s1080 = smul.addr %s1079, 8
          %s1081 = scalar_lea.vmem [#allocation15], %s1080
          %1083 = dma.done %s1078, 128
        $region96: #{tpu_custom_call.1} parent=91 // pred_fallthru
          _
      $region92: #{tpu_custom_call.1} parent=5 // pred_fallthru
        _
    $region6: #{tpu_custom_call.1} parent=1 // loop_footer
      %s28 = sadd.s32 1, %s24
    $region7: #{tpu_custom_call.1} parent=1 // loop_footer_branch
      %23 = sbr.rel target = $region3
    $region8: #{tpu_custom_call.1} parent=1 // loop_exit
      _
    %1084 = vsyncpa [#allocation7], 1
    %s1085 = scalar_lea.sflag [#allocation7], 1
    %1086 = vsyncpa %s1085, 1
    %1087 = vsyncpa [#allocation10], 1
    %s1088 = scalar_lea.sflag [#allocation10], 1
    %1089 = vsyncpa %s1088, 1
    %1090 = vsyncpa [#allocation13], 1
    %1091 = vsyncpa [#allocation8], 1
    %s1092 = scalar_lea.sflag [#allocation8], 1
    %1093 = vsyncpa %s1092, 1

</llo_original>
